<compile_context>
chip_gen: v7x
topology: tpu7x:2x2x1
jax: 0.10.0
libtpu: 0.0.40
codegen_flags: <defaults>
</compile_context>

<pallas_src>
import functools

import jax
import jax.numpy as jnp
from jax import lax
from jax.experimental import pallas as pl
from jax.experimental.pallas import tpu as pltpu

_EPS = 1e-6


def _round_up(x, m):
    return ((x + m - 1) // m) * m


def _vmem_ceiling():
    """Physical VMEM minus headroom for compiler-internal scratch."""
    try:
        cap = int(pltpu.get_tpu_info().vmem_capacity_bytes)
    except Exception:
        cap = 64 << 20
    return max(cap - (8 << 20), 32 << 20)


def _const_spec(shape, index_map):
    """BlockSpec for a constant-index input: single-buffer it (never re-fetched).
    Falls back to the default double-buffered spec if the installed Pallas does
    not expose pipeline_mode/Buffered."""
    try:
        return pl.BlockSpec(shape, index_map, pipeline_mode=pl.Buffered(1))
    except (TypeError, AttributeError):
        return pl.BlockSpec(shape, index_map)


def _layernorm(x, gamma, beta):
    mean = jnp.mean(x, axis=-1, keepdims=True)
    xc = x - mean
    var = jnp.mean(xc * xc, axis=-1, keepdims=True)
    return xc * lax.rsqrt(var + _EPS) * gamma + beta


# ----------------------------------------------------------------------------
# Kernel 1: pre-LN multi-head self-attention + residual
#   grid = (batch, num_q_tiles); K/V use the full sequence each step.
# ----------------------------------------------------------------------------
def _mha_kernel(xq_ref, xkv_ref, g1_ref, b1_ref, wq_ref, wkv_ref, wo_ref,
                o_ref, attn_ref, *, n_head, d_k, d_v):
    xq = xq_ref[0].astype(jnp.float32)                     # (tq, D)
    xkv_b = xkv_ref[0].astype(jnp.bfloat16)                # (S, D)
    tq = xq.shape[0]
    s_kv = xkv_ref.shape[1]
    s_pad = attn_ref.shape[-1]

    # LayerNorm is applied to the query path only (k/v use the raw input),
    # exactly as in MultiHeadAttention.forward.
    qn_b = _layernorm(xq, g1_ref[...], b1_ref[...]).astype(jnp.bfloat16)

    # Full-width projections: one MXU-wide matmul for Q (1/sqrt(d_k) is already
    # folded into Wq by the wrapper) and one for the fused K|V weight.
    q_all = jnp.dot(qn_b, wq_ref[...],
                    preferred_element_type=jnp.float32).astype(jnp.bfloat16)
    kv_all = jnp.dot(xkv_b, wkv_ref[...],
                     preferred_element_type=jnp.float32).astype(jnp.bfloat16)
    k_off = n_head * d_k

    ctx_list = []
    for h in range(n_head):                                # static head loop
        qh = q_all[:, h * d_k:(h + 1) * d_k]
        kh = kv_all[:, h * d_k:(h + 1) * d_k]
        vh = kv_all[:, k_off + h * d_v:k_off + (h + 1) * d_v]

        s = jnp.einsum("qd,kd->qk", qh, kh,
                       preferred_element_type=jnp.float32)
        s = s - jnp.max(s, axis=-1, keepdims=True)
        e = jnp.exp(s)
        p = e / jnp.sum(e, axis=-1, keepdims=True)         # exact softmax

        # Lane-dense bf16 attention writeback (zero-padded to s_pad lanes).
        if s_pad > s_kv:
            p_st = jnp.concatenate(
                [p, jnp.zeros((tq, s_pad - s_kv), jnp.float32)], axis=-1)
        else:
            p_st = p
        attn_ref[0, h] = p_st.astype(attn_ref.dtype)

        # TODO(synk): attention dropout is identity in eval mode.
        ctx_list.append(
            jnp.dot(p.astype(jnp.bfloat16), vh,
                    preferred_element_type=jnp.float32).astype(jnp.bfloat16))

    # Single full-width (K = n_head*d_v) output projection.
    ctx_all = jnp.concatenate(ctx_list, axis=-1)           # (tq, n_head*d_v)
    out = jnp.dot(ctx_all, wo_ref[...], preferred_element_type=jnp.float32)
    # TODO(synk): output-projection dropout is identity in eval mode.
    o_ref[0] = (out + xq).astype(o_ref.dtype)


def _choose_tq(s, target):
    """Query-tile size: full extent if small/ragged, else a multiple of 16
    that divides S (keeps all blocks layout-legal for bf16/f32 outputs)."""
    if s <= target:
        return s
    tq = (target // 16) * 16
    while tq >= 16:
        if s % tq == 0:
            return tq
        tq -= 16
    return s


def multi_head_attention(x, gamma1, beta1, wq, wk, wv, wo, *, n_head, d_k, d_v,
                         tq_target=256):
    """x: (B, S, D). Weights pre-transposed to (in, out) layout, no biases."""
    B, S, D = x.shape
    h_dk, h_dv = n_head * d_k, n_head * d_v
    dkv = h_dk + h_dv

    # Fold 1/temperature into Wq (LN feeds only the Q path); fuse Wk|Wv.
    scale = 1.0 / (d_k ** 0.5)
    wq_b = (wq * scale).astype(jnp.bfloat16)
    wkv_b = jnp.concatenate([wk, wv], axis=1).astype(jnp.bfloat16)
    wo_b = wo.astype(jnp.bfloat16)

    s_pad = _round_up(S, 128)                              # lane-dense attn store
    tq = _choose_tq(S, tq_target)
    n_q = S // tq

    ceiling = _vmem_ceiling()
    weight_bytes = 2 * (D * h_dk + D * dkv + h_dv * D)     # bf16, single-buffered
    io_bytes = (2 * 4 * (tq + S) * D                       # x_q + x_kv tiles (f32, x2)
                + 2 * 4 * tq * D                           # y tile (x2)
                + 2 * 2 * n_head * tq * s_pad)             # attn tile (bf16, x2)
    live_bytes = 6 * (tq * h_dk + S * dkv) + 4 * n_head * tq * S + 2 * tq * h_dv
    needed = weight_bytes + io_bytes + live_bytes + (4 << 20)
    vmem_limit = int(min(max(needed, 32 << 20), ceiling))

    cost = pl.CostEstimate(
        flops=int(2 * B * (S * D * h_dk + n_q * S * D * dkv
                           + n_head * S * S * (d_k + d_v) + S * h_dv * D)),
        transcendentals=int(B * n_head * S * S),
        bytes_accessed=int(B * S * D * x.dtype.itemsize * (2 + n_q)
                           + weight_bytes + B * n_head * S * s_pad * 2),
    )

    kernel = functools.partial(_mha_kernel, n_head=n_head, d_k=d_k, d_v=d_v)
    y, attn = pl.pallas_call(
        kernel,
        out_shape=(jax.ShapeDtypeStruct((B, S, D), x.dtype),
                   jax.ShapeDtypeStruct((B, n_head, S, s_pad), jnp.bfloat16)),
        grid_spec=pltpu.PrefetchScalarGridSpec(
            num_scalar_prefetch=0,
            grid=(B, n_q),
            in_specs=[
                pl.BlockSpec((1, tq, D), lambda b, qi: (b, qi, 0)),   # x (q tile)
                pl.BlockSpec((1, S, D), lambda b, qi: (b, 0, 0)),     # x (full, k/v)
                _const_spec((1, D), lambda b, qi: (0, 0)),            # gamma1
                _const_spec((1, D), lambda b, qi: (0, 0)),            # beta1
                _const_spec((D, h_dk), lambda b, qi: (0, 0)),         # Wq (scaled)
                _const_spec((D, dkv), lambda b, qi: (0, 0)),          # Wk|Wv fused
                _const_spec((h_dv, D), lambda b, qi: (0, 0)),         # Wo
            ],
            out_specs=[
                pl.BlockSpec((1, tq, D), lambda b, qi: (b, qi, 0)),
                pl.BlockSpec((1, n_head, tq, s_pad), lambda b, qi: (b, 0, qi, 0)),
            ],
        ),
        compiler_params=pltpu.CompilerParams(
            dimension_semantics=("parallel", "parallel"),
            vmem_limit_bytes=vmem_limit),
        cost_estimate=cost,
    )(x, x, gamma1, beta1, wq_b, wkv_b, wo_b)

    if s_pad != S:
        attn = attn[..., :S]                               # drop lane padding
    return y, attn


# ----------------------------------------------------------------------------
# Kernel 2: pre-LN FFN + residual + final LayerNorm (row-tiled grid)
# ----------------------------------------------------------------------------
def _ffn_ln_kernel(x_ref, g2_ref, b2_ref, w1_ref, bias1_ref, w2_ref, bias2_ref,
                   g3_ref, b3_ref, o_ref, *, hid_chunk, num_chunks):
    x_in = x_ref[...]                                      # residual, input dtype
    xf = x_in.astype(jnp.float32)
    xn_b = _layernorm(xf, g2_ref[...], b2_ref[...]).astype(jnp.bfloat16)

    def chunk_body(c, y):
        lo = pl.multiple_of(c * hid_chunk, 128)
        h = jnp.dot(xn_b, w1_ref[:, pl.ds(lo, hid_chunk)],
                    preferred_element_type=jnp.float32)
        h = h + bias1_ref[:, pl.ds(lo, hid_chunk)]
        # ReLU kept in f32 (v5e VPU has no bf16); cast only for the W2 matmul.
        h = jnp.maximum(h, 0.0).astype(jnp.bfloat16)
        return y + jnp.dot(h, w2_ref[pl.ds(lo, hid_chunk), :],
                           preferred_element_type=jnp.float32)

    # fori_loop(unroll=True): bounded live ranges, full LLO visibility.
    y = lax.fori_loop(0, num_chunks, chunk_body,
                      jnp.zeros(xf.shape, jnp.float32), unroll=True)

    # TODO(synk): FFN dropout is identity in eval mode.
    y = y + bias2_ref[...] + xf                            # residual add
    # Fused final LayerNorm of EncoderLayer (saves one HBM round trip).
    o_ref[...] = _layernorm(y, g3_ref[...], b3_ref[...]).astype(o_ref.dtype)


def ffn_final_ln(x, gamma2, beta2, w1, b1, w2, b2, gamma3, beta3, *,
                 tm=None, hid_chunk=512):
    """x: (..., d_in). w1: (d_in, d_hid), w2: (d_hid, d_in) (pre-transposed)."""
    orig_shape = x.shape
    d_in = orig_shape[-1]
    d_hid = w1.shape[1]
    assert d_in % 128 == 0 and d_hid % 128 == 0, (
        "d_model / d_inner must be multiples of 128 (lane-dense tiles); "
        "pad the model dims instead of running narrow")

    ceiling = _vmem_ceiling()
    if tm is None:
        # 512-row tiles on 128 MiB chips (v5e/v6e); 256 under v7x's 64 MiB.
        tm = 512 if ceiling >= (100 << 20) else 256

    # Largest multiple of 128 <= hid_chunk that divides d_hid.
    hc = min(_round_up(hid_chunk, 128), d_hid)
    while d_hid % hc != 0:
        hc -= 128
    num_chunks = d_hid // hc

    x2 = x.reshape(-1, d_in)
    n = x2.shape[0]

    # Row tile: multiple of the sublane packing for the dtype; ragged N padded.
    sub = 8 if x2.dtype == jnp.float32 else 16
    tm_eff = min(_round_up(tm, sub), _round_up(n, sub))
    n_pad = _round_up(n, tm_eff)
    if n_pad != n:
        x2 = jnp.pad(x2, ((0, n_pad - n), (0, 0)))

    # bf16-resident, single-buffered weights.
    w1_b = w1.astype(jnp.bfloat16)
    w2_b = w2.astype(jnp.bfloat16)

    weight_bytes = 2 * (d_in * d_hid + d_hid * d_in)       # bf16, single-buffered
    param_bytes = 4 * (d_hid + 5 * d_in)
    io_bytes = 2 * 4 * tm_eff * d_in * 2                   # in + out tiles, x2 buffers
    live_bytes = 4 * tm_eff * (hc + 3 * d_in)
    needed = weight_bytes + param_bytes + io_bytes + live_bytes + (4 << 20)
    vmem_limit = int(min(max(needed, 32 << 20), ceiling))

    cost = pl.CostEstimate(
        flops=int(4 * n_pad * d_in * d_hid),
        transcendentals=int(2 * n_pad),
        bytes_accessed=int(2 * n_pad * d_in * x2.dtype.itemsize   # in + out
                           + weight_bytes + param_bytes),
    )

    kernel = functools.partial(_ffn_ln_kernel, hid_chunk=hc, num_chunks=num_chunks)
    out = pl.pallas_call(
        kernel,
        out_shape=jax.ShapeDtypeStruct((n_pad, d_in), x.dtype),
        grid_spec=pltpu.PrefetchScalarGridSpec(
            num_scalar_prefetch=0,
            grid=(n_pad // tm_eff,),
            in_specs=[
                pl.BlockSpec((tm_eff, d_in), lambda i: (i, 0)),   # x rows
                _const_spec((1, d_in), lambda i: (0, 0)),         # gamma2
                _const_spec((1, d_in), lambda i: (0, 0)),         # beta2
                _const_spec((d_in, d_hid), lambda i: (0, 0)),     # W1 (bf16)
                _const_spec((1, d_hid), lambda i: (0, 0)),        # b1
                _const_spec((d_hid, d_in), lambda i: (0, 0)),     # W2 (bf16)
                _const_spec((1, d_in), lambda i: (0, 0)),         # b2
                _const_spec((1, d_in), lambda i: (0, 0)),         # gamma3
                _const_spec((1, d_in), lambda i: (0, 0)),         # beta3
            ],
            out_specs=pl.BlockSpec((tm_eff, d_in), lambda i: (i, 0)),
        ),
        compiler_params=pltpu.CompilerParams(
            dimension_semantics=("parallel",),
            vmem_limit_bytes=vmem_limit),
        cost_estimate=cost,
    )(x2, gamma2, beta2, w1_b, b1, w2_b, b2, gamma3, beta3)

    if n_pad != n:
        out = out[:n]
    return out.reshape(orig_shape)


# ----------------------------------------------------------------------------
# EncoderLayer forward (self-attention path, eval mode)
# ----------------------------------------------------------------------------
def encoder_layer(x, p, *, n_head, d_k, d_v, tm=None, hid_chunk=512):
    # TODO(synk): y1 is handed off through HBM in f32; full MHA+FFN fusion (or a
    # bf16 handoff) would remove one round trip but changes residual precision.
    y1, attn = multi_head_attention(
        x, p["ln1_g"], p["ln1_b"], p["wq"], p["wk"], p["wv"], p["wo"],
        n_head=n_head, d_k=d_k, d_v=d_v)
    out = ffn_final_ln(
        y1, p["ln2_g"], p["ln2_b"], p["w1"], p["b1"], p["w2"], p["b2"],
        p["ln3_g"], p["ln3_b"], tm=tm, hid_chunk=hid_chunk)
    return out, attn


# ----------------------------------------------------------------------------
# Pure-JAX reference (same bf16-operand / f32-accumulate numerics as kernels)
# ----------------------------------------------------------------------------
def _reference(x, p, *, n_head, d_k, d_v):
    f32 = jnp.float32

    def ln(z, g, b):
        m = jnp.mean(z, -1, keepdims=True)
        v = jnp.mean((z - m) ** 2, -1, keepdims=True)
        return (z - m) * lax.rsqrt(v + _EPS) * g + b

    def mm(a, b):
        return jnp.dot(a.astype(jnp.bfloat16), b.astype(jnp.bfloat16),
                       preferred_element_type=f32)

    B, S, D = x.shape
    xf = x.astype(f32)
    qn = ln(xf, p["ln1_g"][0], p["ln1_b"][0])
    q = mm(qn, p["wq"]).reshape(B, S, n_head, d_k).transpose(0, 2, 1, 3)
    k = mm(xf, p["wk"]).reshape(B, S, n_head, d_k).transpose(0, 2, 1, 3)
    v = mm(xf, p["wv"]).reshape(B, S, n_head, d_v).transpose(0, 2, 1, 3)
    s = jnp.einsum("bhqd,bhkd->bhqk",
                   (q / (d_k ** 0.5)).astype(jnp.bfloat16),
                   k.astype(jnp.bfloat16), preferred_element_type=f32)
    attn = jax.nn.softmax(s, axis=-1)
    ctx = jnp.einsum("bhqk,bhkd->bhqd", attn.astype(jnp.bfloat16),
                     v.astype(jnp.bfloat16), preferred_element_type=f32)
    ctx = ctx.transpose(0, 2, 1, 3).reshape(B, S, n_head * d_v)
    y1 = mm(ctx, p["wo"]) + xf
    xn = ln(y1, p["ln2_g"][0], p["ln2_b"][0])
    h = jnp.maximum(mm(xn, p["w1"]) + p["b1"][0], 0.0)
    y2 = mm(h, p["w2"]) + p["b2"][0] + y1
    return ln(y2, p["ln3_g"][0], p["ln3_b"][0]).astype(x.dtype), attn


if __name__ == "__main__":
    B, S = 2, 8
    D_MODEL, D_INNER = 128, 256          # lane-dense (multiple of 128)
    N_HEAD, D_K, D_V = 4, 32, 32

    key = jax.random.PRNGKey(0)
    ks = jax.random.split(key, 15)

    def normal(k, shape, scale=1.0):
        return scale * jax.random.normal(k, shape, dtype=jnp.float32)

    x = normal(ks[0], (B, S, D_MODEL))

    # nn.Linear stores weight as (out, in); weights below are the transposed
    # (in, out) form the kernels expect.
    params = dict(
        ln1_g=jnp.ones((1, D_MODEL), jnp.float32) + 0.01 * normal(ks[1], (1, D_MODEL)),
        ln1_b=0.01 * normal(ks[2], (1, D_MODEL)),
        wq=normal(ks[3], (D_MODEL, N_HEAD * D_K), scale=D_MODEL ** -0.5),
        wk=normal(ks[4], (D_MODEL, N_HEAD * D_K), scale=D_MODEL ** -0.5),
        wv=normal(ks[5], (D_MODEL, N_HEAD * D_V), scale=D_MODEL ** -0.5),
        wo=normal(ks[6], (N_HEAD * D_V, D_MODEL), scale=(N_HEAD * D_V) ** -0.5),
        ln2_g=jnp.ones((1, D_MODEL), jnp.float32) + 0.01 * normal(ks[7], (1, D_MODEL)),
        ln2_b=0.01 * normal(ks[8], (1, D_MODEL)),
        w1=normal(ks[9], (D_MODEL, D_INNER), scale=D_MODEL ** -0.5),
        b1=0.01 * normal(ks[10], (1, D_INNER)),
        w2=normal(ks[11], (D_INNER, D_MODEL), scale=D_INNER ** -0.5),
        b2=0.01 * normal(ks[12], (1, D_MODEL)),
        ln3_g=jnp.ones((1, D_MODEL), jnp.float32) + 0.01 * normal(ks[13], (1, D_MODEL)),
        ln3_b=0.01 * normal(ks[14], (1, D_MODEL)),
    )

    out, attn = encoder_layer(x, params, n_head=N_HEAD, d_k=D_K, d_v=D_V)
    out = jax.block_until_ready(out)
    attn = jax.block_until_ready(attn)

    ref_out, ref_attn = _reference(x, params, n_head=N_HEAD, d_k=D_K, d_v=D_V)

    assert out.shape == x.shape and out.dtype == x.dtype
    assert attn.shape == (B, N_HEAD, S, S)
    assert jnp.allclose(attn.astype(jnp.float32), ref_attn,
                        atol=2e-2, rtol=2e-2), "attn mismatch"
    assert jnp.allclose(out, ref_out, atol=2e-2, rtol=2e-2), "output mismatch"

    print("KERNEL_OK")
</pallas_src>

<mosaic_0001>
module attributes {stable_mosaic.version = 11 : i64} {
  func.func @_mha_kernel(%arg0: i32, %arg1: i32, %arg2: memref<1x8x128xf32, #tpu.memory_space<vmem>>, %arg3: memref<1x8x128xf32, #tpu.memory_space<vmem>>, %arg4: memref<1x128xf32, #tpu.memory_space<vmem>>, %arg5: memref<1x128xf32, #tpu.memory_space<vmem>>, %arg6: memref<128x128xbf16, #tpu.memory_space<vmem>>, %arg7: memref<128x256xbf16, #tpu.memory_space<vmem>>, %arg8: memref<128x128xbf16, #tpu.memory_space<vmem>>, %arg9: memref<1x8x128xf32, #tpu.memory_space<vmem>>, %arg10: memref<1x4x8x128xbf16, #tpu.memory_space<vmem>>) attributes {dimension_semantics = [#tpu.dimension_semantics<parallel>, #tpu.dimension_semantics<parallel>], iteration_bounds = array<i64: 2, 1>, scalar_prefetch = 0 : i64, scratch_operands = 0 : i64, tpu.core_type = #tpu.core_type<tc>, window_params = [{transform_indices = @transform_0, window_bounds = array<i64: 1, 8, 128>}, {transform_indices = @transform_1, window_bounds = array<i64: 1, 8, 128>}, {pipeline_mode = #tpu.pipeline_mode<synchronous>, transform_indices = @transform_2, window_bounds = array<i64: 1, 128>}, {pipeline_mode = #tpu.pipeline_mode<synchronous>, transform_indices = @transform_3, window_bounds = array<i64: 1, 128>}, {pipeline_mode = #tpu.pipeline_mode<synchronous>, transform_indices = @transform_4, window_bounds = array<i64: 128, 128>}, {pipeline_mode = #tpu.pipeline_mode<synchronous>, transform_indices = @transform_5, window_bounds = array<i64: 128, 256>}, {pipeline_mode = #tpu.pipeline_mode<synchronous>, transform_indices = @transform_6, window_bounds = array<i64: 128, 128>}, {transform_indices = @transform_7, window_bounds = array<i64: 1, 8, 128>}, {transform_indices = @transform_8, window_bounds = array<i64: 1, 4, 8, 128>}]} {
    %c0 = arith.constant 0 : index
    %c0_0 = arith.constant 0 : index
    %c0_1 = arith.constant 0 : index
    %0 = vector.load %arg2[%c0, %c0_0, %c0_1] : memref<1x8x128xf32, #tpu.memory_space<vmem>>, vector<1x8x128xf32>
    %1 = vector.shape_cast %0 : vector<1x8x128xf32> to vector<8x128xf32>
    %c0_2 = arith.constant 0 : index
    %c0_3 = arith.constant 0 : index
    %c0_4 = arith.constant 0 : index
    %2 = vector.load %arg3[%c0_2, %c0_3, %c0_4] : memref<1x8x128xf32, #tpu.memory_space<vmem>>, vector<1x8x128xf32>
    %3 = vector.shape_cast %2 : vector<1x8x128xf32> to vector<8x128xf32>
    %4 = arith.truncf %3 : vector<8x128xf32> to vector<8x128xbf16>
    %c0_5 = arith.constant 0 : index
    %c0_6 = arith.constant 0 : index
    %5 = vector.load %arg4[%c0_5, %c0_6] : memref<1x128xf32, #tpu.memory_space<vmem>>, vector<1x128xf32>
    %c0_7 = arith.constant 0 : index
    %c0_8 = arith.constant 0 : index
    %6 = vector.load %arg5[%c0_7, %c0_8] : memref<1x128xf32, #tpu.memory_space<vmem>>, vector<1x128xf32>
    %cst = arith.constant dense<0.000000e+00> : vector<8xf32>
    %7 = vector.multi_reduction <add>, %1, %cst [1] : vector<8x128xf32> to vector<8xf32>
    %8 = vector.shape_cast %7 : vector<8xf32> to vector<8x1xf32>
    %cst_9 = arith.constant 1.280000e+02 : f32
    %9 = vector.broadcast %cst_9 : f32 to vector<8x1xf32>
    %10 = arith.divf %8, %9 : vector<8x1xf32>
    %11 = vector.broadcast %10 : vector<8x1xf32> to vector<8x128xf32>
    %12 = arith.subf %1, %11 : vector<8x128xf32>
    %13 = arith.mulf %12, %12 : vector<8x128xf32>
    %cst_10 = arith.constant dense<0.000000e+00> : vector<8xf32>
    %14 = vector.multi_reduction <add>, %13, %cst_10 [1] : vector<8x128xf32> to vector<8xf32>
    %15 = vector.shape_cast %14 : vector<8xf32> to vector<8x1xf32>
    %cst_11 = arith.constant 1.280000e+02 : f32
    %16 = vector.broadcast %cst_11 : f32 to vector<8x1xf32>
    %17 = arith.divf %15, %16 : vector<8x1xf32>
    %cst_12 = arith.constant 9.99999997E-7 : f32
    %18 = vector.broadcast %cst_12 : f32 to vector<8x1xf32>
    %19 = arith.addf %17, %18 : vector<8x1xf32>
    %20 = math.rsqrt %19 : vector<8x1xf32>
    %21 = vector.broadcast %20 : vector<8x1xf32> to vector<8x128xf32>
    %22 = arith.mulf %12, %21 : vector<8x128xf32>
    %23 = vector.broadcast %5 : vector<1x128xf32> to vector<8x128xf32>
    %24 = arith.mulf %22, %23 : vector<8x128xf32>
    %25 = vector.broadcast %6 : vector<1x128xf32> to vector<8x128xf32>
    %26 = arith.addf %24, %25 : vector<8x128xf32>
    %27 = arith.truncf %26 : vector<8x128xf32> to vector<8x128xbf16>
    %c0_13 = arith.constant 0 : index
    %c0_14 = arith.constant 0 : index
    %28 = vector.load %arg6[%c0_13, %c0_14] : memref<128x128xbf16, #tpu.memory_space<vmem>>, vector<128x128xbf16>
    %cst_15 = arith.constant dense<0.000000e+00> : vector<8x128xf32>
    %29 = tpu.matmul %27, %28, %cst_15 {dimension_numbers = #tpu.dot_dimension_numbers<[1], [0], [0], [1], [0, 0, 1, 1], [], []>} : vector<8x128xbf16>, vector<128x128xbf16>, vector<8x128xf32> -> vector<8x128xf32>
    %30 = arith.truncf %29 : vector<8x128xf32> to vector<8x128xbf16>
    %c0_16 = arith.constant 0 : index
    %c0_17 = arith.constant 0 : index
    %31 = vector.load %arg7[%c0_16, %c0_17] : memref<128x256xbf16, #tpu.memory_space<vmem>>, vector<128x256xbf16>
    %cst_18 = arith.constant dense<0.000000e+00> : vector<8x256xf32>
    %32 = tpu.matmul %4, %31, %cst_18 {dimension_numbers = #tpu.dot_dimension_numbers<[1], [0], [0], [1], [0, 0, 1, 1], [], []>} : vector<8x128xbf16>, vector<128x256xbf16>, vector<8x256xf32> -> vector<8x256xf32>
    %33 = arith.truncf %32 : vector<8x256xf32> to vector<8x256xbf16>
    %34 = vector.extract_strided_slice %30 {offsets = [0, 0], sizes = [8, 32], strides = [1, 1]} : vector<8x128xbf16> to vector<8x32xbf16>
    %35 = vector.extract_strided_slice %33 {offsets = [0, 0], sizes = [8, 32], strides = [1, 1]} : vector<8x256xbf16> to vector<8x32xbf16>
    %36 = vector.extract_strided_slice %33 {offsets = [0, 128], sizes = [8, 32], strides = [1, 1]} : vector<8x256xbf16> to vector<8x32xbf16>
    "tpu.trace_start"() <{level = 10 : i32, message = "qd,kd->qk"}> : () -> ()
    %cst_19 = arith.constant dense<0.000000e+00> : vector<8x8xf32>
    %37 = tpu.matmul %34, %35, %cst_19 {dimension_numbers = #tpu.dot_dimension_numbers<[1], [1], [0], [0], [0, 0, 1, 0], [], []>} : vector<8x32xbf16>, vector<8x32xbf16>, vector<8x8xf32> -> vector<8x8xf32>
    "tpu.trace_stop"() : () -> ()
    %cst_20 = arith.constant dense<0xFF800000> : vector<8xf32>
    %38 = vector.multi_reduction <maximumf>, %37, %cst_20 [1] : vector<8x8xf32> to vector<8xf32>
    %39 = vector.shape_cast %38 : vector<8xf32> to vector<8x1xf32>
    %40 = vector.broadcast %39 : vector<8x1xf32> to vector<8x8xf32>
    %41 = arith.subf %37, %40 : vector<8x8xf32>
    %42 = math.exp %41 : vector<8x8xf32>
    %cst_21 = arith.constant dense<0.000000e+00> : vector<8xf32>
    %43 = vector.multi_reduction <add>, %42, %cst_21 [1] : vector<8x8xf32> to vector<8xf32>
    %44 = vector.shape_cast %43 : vector<8xf32> to vector<8x1xf32>
    %45 = vector.broadcast %44 : vector<8x1xf32> to vector<8x8xf32>
    %46 = arith.divf %42, %45 : vector<8x8xf32>
    %cst_22 = arith.constant 0.000000e+00 : f32
    %47 = vector.broadcast %cst_22 : f32 to vector<8x120xf32>
    %48 = tpu.concatenate %46, %47 in 1 : vector<8x8xf32>, vector<8x120xf32> -> vector<8x128xf32>
    %49 = arith.truncf %48 : vector<8x128xf32> to vector<8x128xbf16>
    %c0_23 = arith.constant 0 : index
    %c0_24 = arith.constant 0 : index
    %c0_25 = arith.constant 0 : index
    %c0_26 = arith.constant 0 : index
    %50 = vector.load %arg10[%c0_23, %c0_24, %c0_25, %c0_26] : memref<1x4x8x128xbf16, #tpu.memory_space<vmem>>, vector<1x1x8x128xbf16>
    %51 = vector.shape_cast %50 : vector<1x1x8x128xbf16> to vector<8x128xbf16>
    %52 = vector.shape_cast %49 : vector<8x128xbf16> to vector<1x1x8x128xbf16>
    tpu.vector_store %arg10[%c0_23, %c0_24, %c0_25, %c0_26], %52 {strides = array<i32>} : memref<1x4x8x128xbf16, #tpu.memory_space<vmem>>, vector<1x1x8x128xbf16>,
    %53 = arith.truncf %46 : vector<8x8xf32> to vector<8x8xbf16>
    %cst_27 = arith.constant dense<0.000000e+00> : vector<8x32xf32>
    %54 = tpu.matmul %53, %36, %cst_27 {dimension_numbers = #tpu.dot_dimension_numbers<[1], [0], [0], [1], [0, 0, 1, 1], [], []>} : vector<8x8xbf16>, vector<8x32xbf16>, vector<8x32xf32> -> vector<8x32xf32>
    %55 = arith.truncf %54 : vector<8x32xf32> to vector<8x32xbf16>
    %56 = vector.extract_strided_slice %30 {offsets = [0, 32], sizes = [8, 32], strides = [1, 1]} : vector<8x128xbf16> to vector<8x32xbf16>
    %57 = vector.extract_strided_slice %33 {offsets = [0, 32], sizes = [8, 32], strides = [1, 1]} : vector<8x256xbf16> to vector<8x32xbf16>
    %58 = vector.extract_strided_slice %33 {offsets = [0, 160], sizes = [8, 32], strides = [1, 1]} : vector<8x256xbf16> to vector<8x32xbf16>
    "tpu.trace_start"() <{level = 10 : i32, message = "qd,kd->qk"}> : () -> ()
    %cst_28 = arith.constant dense<0.000000e+00> : vector<8x8xf32>
    %59 = tpu.matmul %56, %57, %cst_28 {dimension_numbers = #tpu.dot_dimension_numbers<[1], [1], [0], [0], [0, 0, 1, 0], [], []>} : vector<8x32xbf16>, vector<8x32xbf16>, vector<8x8xf32> -> vector<8x8xf32>
    "tpu.trace_stop"() : () -> ()
    %cst_29 = arith.constant dense<0xFF800000> : vector<8xf32>
    %60 = vector.multi_reduction <maximumf>, %59, %cst_29 [1] : vector<8x8xf32> to vector<8xf32>
    %61 = vector.shape_cast %60 : vector<8xf32> to vector<8x1xf32>
    %62 = vector.broadcast %61 : vector<8x1xf32> to vector<8x8xf32>
    %63 = arith.subf %59, %62 : vector<8x8xf32>
    %64 = math.exp %63 : vector<8x8xf32>
    %cst_30 = arith.constant dense<0.000000e+00> : vector<8xf32>
    %65 = vector.multi_reduction <add>, %64, %cst_30 [1] : vector<8x8xf32> to vector<8xf32>
    %66 = vector.shape_cast %65 : vector<8xf32> to vector<8x1xf32>
    %67 = vector.broadcast %66 : vector<8x1xf32> to vector<8x8xf32>
    %68 = arith.divf %64, %67 : vector<8x8xf32>
    %cst_31 = arith.constant 0.000000e+00 : f32
    %69 = vector.broadcast %cst_31 : f32 to vector<8x120xf32>
    %70 = tpu.concatenate %68, %69 in 1 : vector<8x8xf32>, vector<8x120xf32> -> vector<8x128xf32>
    %71 = arith.truncf %70 : vector<8x128xf32> to vector<8x128xbf16>
    %c0_32 = arith.constant 0 : index
    %c1 = arith.constant 1 : index
    %c0_33 = arith.constant 0 : index
    %c0_34 = arith.constant 0 : index
    %72 = vector.load %arg10[%c0_32, %c1, %c0_33, %c0_34] : memref<1x4x8x128xbf16, #tpu.memory_space<vmem>>, vector<1x1x8x128xbf16>
    %73 = vector.shape_cast %72 : vector<1x1x8x128xbf16> to vector<8x128xbf16>
    %74 = vector.shape_cast %71 : vector<8x128xbf16> to vector<1x1x8x128xbf16>
    tpu.vector_store %arg10[%c0_32, %c1, %c0_33, %c0_34], %74 {strides = array<i32>} : memref<1x4x8x128xbf16, #tpu.memory_space<vmem>>, vector<1x1x8x128xbf16>,
    %75 = arith.truncf %68 : vector<8x8xf32> to vector<8x8xbf16>
    %cst_35 = arith.constant dense<0.000000e+00> : vector<8x32xf32>
    %76 = tpu.matmul %75, %58, %cst_35 {dimension_numbers = #tpu.dot_dimension_numbers<[1], [0], [0], [1], [0, 0, 1, 1], [], []>} : vector<8x8xbf16>, vector<8x32xbf16>, vector<8x32xf32> -> vector<8x32xf32>
    %77 = arith.truncf %76 : vector<8x32xf32> to vector<8x32xbf16>
    %78 = vector.extract_strided_slice %30 {offsets = [0, 64], sizes = [8, 32], strides = [1, 1]} : vector<8x128xbf16> to vector<8x32xbf16>
    %79 = vector.extract_strided_slice %33 {offsets = [0, 64], sizes = [8, 32], strides = [1, 1]} : vector<8x256xbf16> to vector<8x32xbf16>
    %80 = vector.extract_strided_slice %33 {offsets = [0, 192], sizes = [8, 32], strides = [1, 1]} : vector<8x256xbf16> to vector<8x32xbf16>
    "tpu.trace_start"() <{level = 10 : i32, message = "qd,kd->qk"}> : () -> ()
    %cst_36 = arith.constant dense<0.000000e+00> : vector<8x8xf32>
    %81 = tpu.matmul %78, %79, %cst_36 {dimension_numbers = #tpu.dot_dimension_numbers<[1], [1], [0], [0], [0, 0, 1, 0], [], []>} : vector<8x32xbf16>, vector<8x32xbf16>, vector<8x8xf32> -> vector<8x8xf32>
    "tpu.trace_stop"() : () -> ()
    %cst_37 = arith.constant dense<0xFF800000> : vector<8xf32>
    %82 = vector.multi_reduction <maximumf>, %81, %cst_37 [1] : vector<8x8xf32> to vector<8xf32>
    %83 = vector.shape_cast %82 : vector<8xf32> to vector<8x1xf32>
    %84 = vector.broadcast %83 : vector<8x1xf32> to vector<8x8xf32>
    %85 = arith.subf %81, %84 : vector<8x8xf32>
    %86 = math.exp %85 : vector<8x8xf32>
    %cst_38 = arith.constant dense<0.000000e+00> : vector<8xf32>
    %87 = vector.multi_reduction <add>, %86, %cst_38 [1] : vector<8x8xf32> to vector<8xf32>
    %88 = vector.shape_cast %87 : vector<8xf32> to vector<8x1xf32>
    %89 = vector.broadcast %88 : vector<8x1xf32> to vector<8x8xf32>
    %90 = arith.divf %86, %89 : vector<8x8xf32>
    %cst_39 = arith.constant 0.000000e+00 : f32
    %91 = vector.broadcast %cst_39 : f32 to vector<8x120xf32>
    %92 = tpu.concatenate %90, %91 in 1 : vector<8x8xf32>, vector<8x120xf32> -> vector<8x128xf32>
    %93 = arith.truncf %92 : vector<8x128xf32> to vector<8x128xbf16>
    %c0_40 = arith.constant 0 : index
    %c2 = arith.constant 2 : index
    %c0_41 = arith.constant 0 : index
    %c0_42 = arith.constant 0 : index
    %94 = vector.load %arg10[%c0_40, %c2, %c0_41, %c0_42] : memref<1x4x8x128xbf16, #tpu.memory_space<vmem>>, vector<1x1x8x128xbf16>
    %95 = vector.shape_cast %94 : vector<1x1x8x128xbf16> to vector<8x128xbf16>
    %96 = vector.shape_cast %93 : vector<8x128xbf16> to vector<1x1x8x128xbf16>
    tpu.vector_store %arg10[%c0_40, %c2, %c0_41, %c0_42], %96 {strides = array<i32>} : memref<1x4x8x128xbf16, #tpu.memory_space<vmem>>, vector<1x1x8x128xbf16>,
    %97 = arith.truncf %90 : vector<8x8xf32> to vector<8x8xbf16>
    %cst_43 = arith.constant dense<0.000000e+00> : vector<8x32xf32>
    %98 = tpu.matmul %97, %80, %cst_43 {dimension_numbers = #tpu.dot_dimension_numbers<[1], [0], [0], [1], [0, 0, 1, 1], [], []>} : vector<8x8xbf16>, vector<8x32xbf16>, vector<8x32xf32> -> vector<8x32xf32>
    %99 = arith.truncf %98 : vector<8x32xf32> to vector<8x32xbf16>
    %100 = vector.extract_strided_slice %30 {offsets = [0, 96], sizes = [8, 32], strides = [1, 1]} : vector<8x128xbf16> to vector<8x32xbf16>
    %101 = vector.extract_strided_slice %33 {offsets = [0, 96], sizes = [8, 32], strides = [1, 1]} : vector<8x256xbf16> to vector<8x32xbf16>
    %102 = vector.extract_strided_slice %33 {offsets = [0, 224], sizes = [8, 32], strides = [1, 1]} : vector<8x256xbf16> to vector<8x32xbf16>
    "tpu.trace_start"() <{level = 10 : i32, message = "qd,kd->qk"}> : () -> ()
    %cst_44 = arith.constant dense<0.000000e+00> : vector<8x8xf32>
    %103 = tpu.matmul %100, %101, %cst_44 {dimension_numbers = #tpu.dot_dimension_numbers<[1], [1], [0], [0], [0, 0, 1, 0], [], []>} : vector<8x32xbf16>, vector<8x32xbf16>, vector<8x8xf32> -> vector<8x8xf32>
    "tpu.trace_stop"() : () -> ()
    %cst_45 = arith.constant dense<0xFF800000> : vector<8xf32>
    %104 = vector.multi_reduction <maximumf>, %103, %cst_45 [1] : vector<8x8xf32> to vector<8xf32>
    %105 = vector.shape_cast %104 : vector<8xf32> to vector<8x1xf32>
    %106 = vector.broadcast %105 : vector<8x1xf32> to vector<8x8xf32>
    %107 = arith.subf %103, %106 : vector<8x8xf32>
    %108 = math.exp %107 : vector<8x8xf32>
    %cst_46 = arith.constant dense<0.000000e+00> : vector<8xf32>
    %109 = vector.multi_reduction <add>, %108, %cst_46 [1] : vector<8x8xf32> to vector<8xf32>
    %110 = vector.shape_cast %109 : vector<8xf32> to vector<8x1xf32>
    %111 = vector.broadcast %110 : vector<8x1xf32> to vector<8x8xf32>
    %112 = arith.divf %108, %111 : vector<8x8xf32>
    %cst_47 = arith.constant 0.000000e+00 : f32
    %113 = vector.broadcast %cst_47 : f32 to vector<8x120xf32>
    %114 = tpu.concatenate %112, %113 in 1 : vector<8x8xf32>, vector<8x120xf32> -> vector<8x128xf32>
    %115 = arith.truncf %114 : vector<8x128xf32> to vector<8x128xbf16>
    %c0_48 = arith.constant 0 : index
    %c3 = arith.constant 3 : index
    %c0_49 = arith.constant 0 : index
    %c0_50 = arith.constant 0 : index
    %116 = vector.load %arg10[%c0_48, %c3, %c0_49, %c0_50] : memref<1x4x8x128xbf16, #tpu.memory_space<vmem>>, vector<1x1x8x128xbf16>
    %117 = vector.shape_cast %116 : vector<1x1x8x128xbf16> to vector<8x128xbf16>
    %118 = vector.shape_cast %115 : vector<8x128xbf16> to vector<1x1x8x128xbf16>
    tpu.vector_store %arg10[%c0_48, %c3, %c0_49, %c0_50], %118 {strides = array<i32>} : memref<1x4x8x128xbf16, #tpu.memory_space<vmem>>, vector<1x1x8x128xbf16>,
    %119 = arith.truncf %112 : vector<8x8xf32> to vector<8x8xbf16>
    %cst_51 = arith.constant dense<0.000000e+00> : vector<8x32xf32>
    %120 = tpu.matmul %119, %102, %cst_51 {dimension_numbers = #tpu.dot_dimension_numbers<[1], [0], [0], [1], [0, 0, 1, 1], [], []>} : vector<8x8xbf16>, vector<8x32xbf16>, vector<8x32xf32> -> vector<8x32xf32>
    %121 = arith.truncf %120 : vector<8x32xf32> to vector<8x32xbf16>
    %122 = tpu.concatenate %55, %77, %99, %121 in 1 : vector<8x32xbf16>, vector<8x32xbf16>, vector<8x32xbf16>, vector<8x32xbf16> -> vector<8x128xbf16>
    %c0_52 = arith.constant 0 : index
    %c0_53 = arith.constant 0 : index
    %123 = vector.load %arg8[%c0_52, %c0_53] : memref<128x128xbf16, #tpu.memory_space<vmem>>, vector<128x128xbf16>
    %cst_54 = arith.constant dense<0.000000e+00> : vector<8x128xf32>
    %124 = tpu.matmul %122, %123, %cst_54 {dimension_numbers = #tpu.dot_dimension_numbers<[1], [0], [0], [1], [0, 0, 1, 1], [], []>} : vector<8x128xbf16>, vector<128x128xbf16>, vector<8x128xf32> -> vector<8x128xf32>
    %125 = arith.addf %124, %1 : vector<8x128xf32>
    %c0_55 = arith.constant 0 : index
    %c0_56 = arith.constant 0 : index
    %c0_57 = arith.constant 0 : index
    %126 = vector.load %arg9[%c0_55, %c0_56, %c0_57] : memref<1x8x128xf32, #tpu.memory_space<vmem>>, vector<1x8x128xf32>
    %127 = vector.shape_cast %126 : vector<1x8x128xf32> to vector<8x128xf32>
    %128 = vector.shape_cast %125 : vector<8x128xf32> to vector<1x8x128xf32>
    tpu.vector_store %arg9[%c0_55, %c0_56, %c0_57], %128 {strides = array<i32>} : memref<1x8x128xf32, #tpu.memory_space<vmem>>, vector<1x8x128xf32>,
    return
  }
  func.func @transform_0(%arg0: i32, %arg1: i32) -> (i32, i32, i32) {
    %c0_i32 = arith.constant 0 : i32
    %c0_i32_0 = arith.constant 0 : i32
    return %arg0, %arg1, %c0_i32 : i32, i32, i32
  }
  func.func @transform_1(%arg0: i32, %arg1: i32) -> (i32, i32, i32) {
    %c0_i32 = arith.constant 0 : i32
    %c0_i32_0 = arith.constant 0 : i32
    %c0_i32_1 = arith.constant 0 : i32
    return %arg0, %c0_i32, %c0_i32_0 : i32, i32, i32
  }
  func.func @transform_2(%arg0: i32, %arg1: i32) -> (i32, i32) {
    %c0_i32 = arith.constant 0 : i32
    %c0_i32_0 = arith.constant 0 : i32
    %c0_i32_1 = arith.constant 0 : i32
    return %c0_i32, %c0_i32_0 : i32, i32
  }
  func.func @transform_3(%arg0: i32, %arg1: i32) -> (i32, i32) {
    %c0_i32 = arith.constant 0 : i32
    %c0_i32_0 = arith.constant 0 : i32
    %c0_i32_1 = arith.constant 0 : i32
    return %c0_i32, %c0_i32_0 : i32, i32
  }
  func.func @transform_4(%arg0: i32, %arg1: i32) -> (i32, i32) {
    %c0_i32 = arith.constant 0 : i32
    %c0_i32_0 = arith.constant 0 : i32
    %c0_i32_1 = arith.constant 0 : i32
    return %c0_i32, %c0_i32_0 : i32, i32
  }
  func.func @transform_5(%arg0: i32, %arg1: i32) -> (i32, i32) {
    %c0_i32 = arith.constant 0 : i32
    %c0_i32_0 = arith.constant 0 : i32
    %c0_i32_1 = arith.constant 0 : i32
    return %c0_i32, %c0_i32_0 : i32, i32
  }
  func.func @transform_6(%arg0: i32, %arg1: i32) -> (i32, i32) {
    %c0_i32 = arith.constant 0 : i32
    %c0_i32_0 = arith.constant 0 : i32
    %c0_i32_1 = arith.constant 0 : i32
    return %c0_i32, %c0_i32_0 : i32, i32
  }
  func.func @transform_7(%arg0: i32, %arg1: i32) -> (i32, i32, i32) {
    %c0_i32 = arith.constant 0 : i32
    %c0_i32_0 = arith.constant 0 : i32
    return %arg0, %arg1, %c0_i32 : i32, i32, i32
  }
  func.func @transform_8(%arg0: i32, %arg1: i32) -> (i32, i32, i32, i32) {
    %c0_i32 = arith.constant 0 : i32
    %c0_i32_0 = arith.constant 0 : i32
    %c0_i32_1 = arith.constant 0 : i32
    return %arg0, %c0_i32, %arg1, %c0_i32_0 : i32, i32, i32, i32
  }
}

</mosaic_0001>

<llo_original>
// kernel: tpu_custom_call.1
$region0: #{tpu_custom_call.1}
  #allocation0 [shape = 'u32[]', space=smem, size = 0x4, offset = 0x4, fixed_abs, tag = 'smem constant byte address 0x4 - core index']
  #allocation1 [shape = 'u32[144,128]{1,0:T(1,128)}', space=vmem, size = 0x12000, scoped, tag = 'internal scratch']
  %s0 = inlined_call_operand.hbm [shape: f32[2,8,128], index: 0, kind: input, shape index: {}]
  %s1 = inlined_call_operand.hbm [shape: f32[2,8,128], index: 1, kind: input, shape index: {}]
  %s2 = inlined_call_operand.vmem [shape: f32[1,128], index: 2, kind: input, shape index: {}]
  %s3 = inlined_call_operand.vmem [shape: f32[1,128], index: 3, kind: input, shape index: {}]
  %s4 = inlined_call_operand.hbm [shape: bf16[128,128], index: 4, kind: input, shape index: {}]
  %s5 = inlined_call_operand.hbm [shape: bf16[128,256], index: 5, kind: input, shape index: {}]
  %s6 = inlined_call_operand.hbm [shape: bf16[128,128], index: 6, kind: input, shape index: {}]
  %s7 = inlined_call_operand.hbm [shape: f32[2,8,128], index: 7, kind: output, shape index: {0}]
  %s8 = inlined_call_operand.hbm [shape: bf16[2,4,8,128], index: 8, kind: output, shape index: {1}]
  %9 = xla_tuple %s7, %s8
  %s10 = sld [smem:[#allocation0]]
  $region89: #{tpu_custom_call.1} parent=0
    _
  %s12 = ssub.s32 1, %s10
  %s13 = scalar_select 0, %s12, %s10
  $region1: #{tpu_custom_call.1} parent=0
    #allocation2 [shape = 'u8[8192]{0}', space=vmem, size = 0x2000, scoped, tag = 'input window, operand 0']
    #allocation3 [shape = 's32[2]{0}', space=sflag, size = 0x8, scoped, tag = 'scoped memory for tpu_custom_call.1']
    #allocation4 [shape = 's32[2]{0}', space=sflag, size = 0x8, scoped, tag = 'scoped memory for tpu_custom_call.1']
    #allocation5 [shape = 'u8[8192]{0}', space=vmem, size = 0x2000, scoped, tag = 'input window, operand 1']
    #allocation6 [shape = 's32[2]{0}', space=sflag, size = 0x8, scoped, tag = 'scoped memory for tpu_custom_call.1']
    #allocation7 [shape = 'u8[32768]{0}', space=vmem, size = 0x8000, scoped, tag = 'input window, operand 4, single buffered']
    #allocation8 [shape = 'u8[65536]{0}', space=vmem, size = 0x10000, scoped, tag = 'input window, operand 5, single buffered']
    #allocation9 [shape = 's32[1]{0}', space=sflag, size = 0x4, scoped, tag = 'scoped memory for tpu_custom_call.1']
    #allocation10 [shape = 'u8[32768]{0}', space=vmem, size = 0x8000, scoped, tag = 'input window, operand 6, single buffered']
    #allocation11 [shape = 'u8[8192]{0}', space=vmem, size = 0x2000, scoped, tag = 'output window, operand 0']
    #allocation12 [shape = 'u8[16384]{0}', space=vmem, size = 0x4000, scoped, tag = 'output window, operand 1']
    #allocation13 [shape = 's32[2]{0}', space=sflag, size = 0x8, scoped, tag = 'scoped memory for tpu_custom_call.1']
    %14 = vsyncpa [#allocation3], 0
    %s15 = scalar_lea.sflag [#allocation3], 1
    %16 = vsyncpa %s15, 0
    %17 = vsyncpa [#allocation6], 0
    %s18 = scalar_lea.sflag [#allocation6], 1
    %19 = vsyncpa %s18, 0
    %20 = vsyncpa [#allocation9], 0
    %21 = vsyncpa [#allocation4], 0
    %s22 = scalar_lea.sflag [#allocation4], 1
    %23 = vsyncpa %s22, 0
    %24 = vsyncpa [#allocation13], 0
    %s25 = scalar_lea.sflag [#allocation13], 1
    %26 = vsyncpa %s25, 0
    loop: start=0, step=1, limit=4
    $region2: #{tpu_custom_call.1} parent=1 // loop_pre_header
      _
    $region3: #{tpu_custom_call.1} parent=1 // loop_header
      %s28 = sphi 0, %s32
      %p29 = scmp.ge.s32.totalorder %s28, 4
      %s35 = sphi 0, %s47
      %s36 = sphi 0, %s43
      %s37 = sphi 0, %s35
      %s38 = sphi 0, %s36
      %s39 = sphi 0, %s37
      %s40 = sphi 0, %s38
      %s52 = sphi 0, %s54
      %s55 = sphi 0, %s52
      %s56 = sphi 0, %s55
      %s72 = sphi 0, %s56
      %s78 = sphi 0, %s80
      %s81 = sphi 0, %s78
      %s82 = sphi 0, %s81
      %s98 = sphi 0, %s82
      %s102 = sphi 0, %s102
      %s104 = sphi 0, %s102
      %s105 = sphi 0, %s104
      %s119 = sphi 0, %s105
      %s123 = sphi 0, %s123
      %s125 = sphi 0, %s123
      %s126 = sphi 0, %s125
      %s140 = sphi 0, %s126
      %s144 = sphi 0, %s144
      %s146 = sphi 0, %s144
      %s147 = sphi 0, %s146
      %s161 = sphi 0, %s147
      %s165 = sphi 0, %s165
      %s167 = sphi 0, %s165
      %s168 = sphi 0, %s167
      %s182 = sphi 0, %s168
      %s186 = sphi 0, %s186
      %s188 = sphi 0, %s186
      %s189 = sphi 0, %s188
      %s203 = sphi 0, %s189
      %s211 = sphi 0, %s213
      %s214 = sphi 0, %s211
      %s215 = sphi 0, %s214
      %s231 = sphi 0, %s215
      %s239 = sphi 0, %s241
      %s242 = sphi 0, %s239
      %s243 = sphi 0, %s242
      %s259 = sphi 0, %s243
    $region4: #{tpu_custom_call.1} parent=1 // loop_header_branch
      %31 = sbr.rel (%p29) target = $region8
    $region5: #{tpu_custom_call.1} parent=1 // loop_body
      %s33 = ssub.s32 %s28, 1
      %s34 = ssub.s32 %s28, 2
      %s41 = sadd.s32 1, %s36
      %p42 = scmp.ge.s32.totalorder %s41, 1
      %s43 = scalar_select %p42, 0, %s41
      %s44 = sadd.s32 1, %s35
      %s45 = scalar_select %p42, %s44, %s35
      %p46 = scmp.ge.s32.totalorder %s45, 2
      %s47 = scalar_select %p46, 0, %s45
      %s48 = ssub.s32 %s35, %s47
      %s49 = ssub.s32 %s36, %s43
      %s50 = sor.u32 %s48, %s49
      %p51 = scmp.eq.s32.totalorder %s50, 0
      %s53 = sadd.s32 %s52, 1
      %s54 = scalar_select %p51, %s52, %s53
      %p57 = pneg %p51
      %p58 = scmp.eq.s32.totalorder %s28, 1
      %p59 = por %p57, %p58
      %p60 = scmp.ne.s32.totalorder %s52, %s55
      %p61 = scmp.eq.s32.totalorder %s28, 0
      %p62 = por %p60, %p61
      %p63 = scmp.ne.s32.totalorder %s52, %s55
      %p64 = scmp.eq.s32.totalorder %s33, 1
      %p65 = por %p63, %p64
      %p66 = scmp.ne.s32.totalorder %s55, %s56
      %p67 = scmp.eq.s32.totalorder %s33, 0
      %p68 = por %p66, %p67
      %p69 = scmp.ne.s32.totalorder %s55, %s56
      %p70 = scmp.eq.s32.totalorder %s34, 1
      %p71 = por %p69, %p70
      %p73 = scmp.ne.s32.totalorder %s56, %s72
      %p74 = scmp.eq.s32.totalorder %s34, 0
      %p75 = por %p73, %p74
      %s76 = ssub.s32 %s35, %s47
      %p77 = scmp.eq.s32.totalorder %s76, 0
      %s79 = sadd.s32 %s78, 1
      %s80 = scalar_select %p77, %s78, %s79
      %p83 = pneg %p77
      %p84 = scmp.eq.s32.totalorder %s28, 1
      %p85 = por %p83, %p84
      %p86 = scmp.ne.s32.totalorder %s78, %s81
      %p87 = scmp.eq.s32.totalorder %s28, 0
      %p88 = por %p86, %p87
      %p89 = scmp.ne.s32.totalorder %s78, %s81
      %p90 = scmp.eq.s32.totalorder %s33, 1
      %p91 = por %p89, %p90
      %p92 = scmp.ne.s32.totalorder %s81, %s82
      %p93 = scmp.eq.s32.totalorder %s33, 0
      %p94 = por %p92, %p93
      %p95 = scmp.ne.s32.totalorder %s81, %s82
      %p96 = scmp.eq.s32.totalorder %s34, 1
      %p97 = por %p95, %p96
      %p99 = scmp.ne.s32.totalorder %s82, %s98
      %p100 = scmp.eq.s32.totalorder %s34, 0
      %p101 = por %p99, %p100
      %s103 = sadd.s32 %s102, 1
      %p106 = scmp.eq.s32.totalorder %s28, 1
      %p107 = scmp.ne.s32.totalorder %s102, %s104
      %p108 = scmp.eq.s32.totalorder %s28, 0
      %p109 = por %p107, %p108
      %p110 = scmp.ne.s32.totalorder %s102, %s104
      %p111 = scmp.eq.s32.totalorder %s33, 1
      %p112 = por %p110, %p111
      %p113 = scmp.ne.s32.totalorder %s104, %s105
      %p114 = scmp.eq.s32.totalorder %s33, 0
      %p115 = por %p113, %p114
      %p116 = scmp.ne.s32.totalorder %s104, %s105
      %p117 = scmp.eq.s32.totalorder %s34, 1
      %p118 = por %p116, %p117
      %p120 = scmp.ne.s32.totalorder %s105, %s119
      %p121 = scmp.eq.s32.totalorder %s34, 0
      %p122 = por %p120, %p121
      %s124 = sadd.s32 %s123, 1
      %p127 = scmp.eq.s32.totalorder %s28, 1
      %p128 = scmp.ne.s32.totalorder %s123, %s125
      %p129 = scmp.eq.s32.totalorder %s28, 0
      %p130 = por %p128, %p129
      %p131 = scmp.ne.s32.totalorder %s123, %s125
      %p132 = scmp.eq.s32.totalorder %s33, 1
      %p133 = por %p131, %p132
      %p134 = scmp.ne.s32.totalorder %s125, %s126
      %p135 = scmp.eq.s32.totalorder %s33, 0
      %p136 = por %p134, %p135
      %p137 = scmp.ne.s32.totalorder %s125, %s126
      %p138 = scmp.eq.s32.totalorder %s34, 1
      %p139 = por %p137, %p138
      %p141 = scmp.ne.s32.totalorder %s126, %s140
      %p142 = scmp.eq.s32.totalorder %s34, 0
      %p143 = por %p141, %p142
      %s145 = sadd.s32 %s144, 1
      %p148 = scmp.eq.s32.totalorder %s28, 1
      %p149 = scmp.ne.s32.totalorder %s144, %s146
      %p150 = scmp.eq.s32.totalorder %s28, 0
      %p151 = por %p149, %p150
      %p152 = scmp.ne.s32.totalorder %s144, %s146
      %p153 = scmp.eq.s32.totalorder %s33, 1
      %p154 = por %p152, %p153
      %p155 = scmp.ne.s32.totalorder %s146, %s147
      %p156 = scmp.eq.s32.totalorder %s33, 0
      %p157 = por %p155, %p156
      %p158 = scmp.ne.s32.totalorder %s146, %s147
      %p159 = scmp.eq.s32.totalorder %s34, 1
      %p160 = por %p158, %p159
      %p162 = scmp.ne.s32.totalorder %s147, %s161
      %p163 = scmp.eq.s32.totalorder %s34, 0
      %p164 = por %p162, %p163
      %s166 = sadd.s32 %s165, 1
      %p169 = scmp.eq.s32.totalorder %s28, 1
      %p170 = scmp.ne.s32.totalorder %s165, %s167
      %p171 = scmp.eq.s32.totalorder %s28, 0
      %p172 = por %p170, %p171
      %p173 = scmp.ne.s32.totalorder %s165, %s167
      %p174 = scmp.eq.s32.totalorder %s33, 1
      %p175 = por %p173, %p174
      %p176 = scmp.ne.s32.totalorder %s167, %s168
      %p177 = scmp.eq.s32.totalorder %s33, 0
      %p178 = por %p176, %p177
      %p179 = scmp.ne.s32.totalorder %s167, %s168
      %p180 = scmp.eq.s32.totalorder %s34, 1
      %p181 = por %p179, %p180
      %p183 = scmp.ne.s32.totalorder %s168, %s182
      %p184 = scmp.eq.s32.totalorder %s34, 0
      %p185 = por %p183, %p184
      %s187 = sadd.s32 %s186, 1
      %p190 = scmp.eq.s32.totalorder %s28, 1
      %p191 = scmp.ne.s32.totalorder %s186, %s188
      %p192 = scmp.eq.s32.totalorder %s28, 0
      %p193 = por %p191, %p192
      %p194 = scmp.ne.s32.totalorder %s186, %s188
      %p195 = scmp.eq.s32.totalorder %s33, 1
      %p196 = por %p194, %p195
      %p197 = scmp.ne.s32.totalorder %s188, %s189
      %p198 = scmp.eq.s32.totalorder %s33, 0
      %p199 = por %p197, %p198
      %p200 = scmp.ne.s32.totalorder %s188, %s189
      %p201 = scmp.eq.s32.totalorder %s34, 1
      %p202 = por %p200, %p201
      %p204 = scmp.ne.s32.totalorder %s189, %s203
      %p205 = scmp.eq.s32.totalorder %s34, 0
      %p206 = por %p204, %p205
      %s207 = ssub.s32 %s35, %s47
      %s208 = ssub.s32 %s36, %s43
      %s209 = sor.u32 %s207, %s208
      %p210 = scmp.eq.s32.totalorder %s209, 0
      %s212 = sadd.s32 %s211, 1
      %s213 = scalar_select %p210, %s211, %s212
      %p216 = pneg %p210
      %p217 = scmp.eq.s32.totalorder %s28, 1
      %p218 = por %p216, %p217
      %p219 = scmp.ne.s32.totalorder %s211, %s214
      %p220 = scmp.eq.s32.totalorder %s28, 0
      %p221 = por %p219, %p220
      %p222 = scmp.ne.s32.totalorder %s211, %s214
      %p223 = scmp.eq.s32.totalorder %s33, 1
      %p224 = por %p222, %p223
      %p225 = scmp.ne.s32.totalorder %s214, %s215
      %p226 = scmp.eq.s32.totalorder %s33, 0
      %p227 = por %p225, %p226
      %p228 = scmp.ne.s32.totalorder %s214, %s215
      %p229 = scmp.eq.s32.totalorder %s34, 1
      %p230 = por %p228, %p229
      %p232 = scmp.ne.s32.totalorder %s215, %s231
      %p233 = scmp.eq.s32.totalorder %s34, 0
      %p234 = por %p232, %p233
      %s235 = ssub.s32 %s35, %s47
      %s236 = ssub.s32 %s36, %s43
      %s237 = sor.u32 %s235, %s236
      %p238 = scmp.eq.s32.totalorder %s237, 0
      %s240 = sadd.s32 %s239, 1
      %s241 = scalar_select %p238, %s239, %s240
      %p244 = pneg %p238
      %p245 = scmp.eq.s32.totalorder %s28, 1
      %p246 = por %p244, %p245
      %p247 = scmp.ne.s32.totalorder %s239, %s242
      %p248 = scmp.eq.s32.totalorder %s28, 0
      %p249 = por %p247, %p248
      %p250 = scmp.ne.s32.totalorder %s239, %s242
      %p251 = scmp.eq.s32.totalorder %s33, 1
      %p252 = por %p250, %p251
      %p253 = scmp.ne.s32.totalorder %s242, %s243
      %p254 = scmp.eq.s32.totalorder %s33, 0
      %p255 = por %p253, %p254
      %p256 = scmp.ne.s32.totalorder %s242, %s243
      %p257 = scmp.eq.s32.totalorder %s34, 1
      %p258 = por %p256, %p257
      %p260 = scmp.ne.s32.totalorder %s243, %s259
      %p261 = scmp.eq.s32.totalorder %s34, 0
      %p262 = por %p260, %p261
      %p263 = scmp.le.s32.totalorder 1, %s28
      %p264 = scmp.lt.s32.totalorder %s28, 3
      %p265 = pnand %p263, %p264
      %p266 = pneg %p265
      // Predicated region
      $region9: #{tpu_custom_call.1} parent=5 // pred_check
        _
      $region10: #{tpu_custom_call.1} parent=5 // pred_check_branch
        %268 = sbr.rel (%p265) target = $region12
      $region11: #{tpu_custom_call.1} parent=5 // pred_region
        %s269 = ssub.s32 %s28, 1
        // Predicated region
        $region13: #{tpu_custom_call.1} parent=11 // pred_check
          %p270 = pneg %p115
        $region14: #{tpu_custom_call.1} parent=11 // pred_check_branch
          %272 = sbr.rel (%p270) target = $region16
        $region15: #{tpu_custom_call.1} parent=11 // pred_region
          _
        $region16: #{tpu_custom_call.1} parent=11 // pred_fallthru
          _
        // Predicated region
        $region17: #{tpu_custom_call.1} parent=11 // pred_check
          %p273 = pneg %p136
        $region18: #{tpu_custom_call.1} parent=11 // pred_check_branch
          %275 = sbr.rel (%p273) target = $region20
        $region19: #{tpu_custom_call.1} parent=11 // pred_region
          _
        $region20: #{tpu_custom_call.1} parent=11 // pred_fallthru
          _
        // Predicated region
        $region21: #{tpu_custom_call.1} parent=11 // pred_check
          %p276 = pneg %p157
        $region22: #{tpu_custom_call.1} parent=11 // pred_check_branch
          %278 = sbr.rel (%p276) target = $region24
        $region23: #{tpu_custom_call.1} parent=11 // pred_region
          %s280 = ssub.s32 1024, 1024
          %281 = vsyncadd [#allocation6], %s280
          %s282 = sshll.u32 [#allocation7], 4
          %s283 = int_to_ptr.vmem [resolvable:$true] %s282
          %288 = dma.hbm_to_vmem [thread:$0]  %s4, 1024, %s283, [#allocation6], 64, 64, 4
        $region24: #{tpu_custom_call.1} parent=11 // pred_fallthru
          _
        // Predicated region
        $region25: #{tpu_custom_call.1} parent=11 // pred_check
          %p289 = pneg %p178
        $region26: #{tpu_custom_call.1} parent=11 // pred_check_branch
          %291 = sbr.rel (%p289) target = $region28
        $region27: #{tpu_custom_call.1} parent=11 // pred_region
          %s293 = ssub.s32 2048, 2048
          %294 = vsyncadd [#allocation9], %s293
          %s295 = sshll.u32 [#allocation8], 4
          %s296 = int_to_ptr.vmem [resolvable:$true] %s295
          %301 = dma.hbm_to_vmem [thread:$0]  %s5, 2048, %s296, [#allocation9], 128, 128, 8
        $region28: #{tpu_custom_call.1} parent=11 // pred_fallthru
          _
        // Predicated region
        $region29: #{tpu_custom_call.1} parent=11 // pred_check
          %p302 = pneg %p199
        $region30: #{tpu_custom_call.1} parent=11 // pred_check_branch
          %304 = sbr.rel (%p302) target = $region32
        $region31: #{tpu_custom_call.1} parent=11 // pred_region
          %s306 = ssub.s32 1024, 1024
          %307 = vsyncadd [#allocation9], %s306
          %s308 = sshll.u32 [#allocation10], 4
          %s309 = int_to_ptr.vmem [resolvable:$true] %s308
          %314 = dma.hbm_to_vmem [thread:$0]  %s6, 1024, %s309, [#allocation9], 64, 64, 4
        $region32: #{tpu_custom_call.1} parent=11 // pred_fallthru
          _
      $region12: #{tpu_custom_call.1} parent=5 // pred_fallthru
        _
      %p315 = scmp.lt.s32.totalorder %s28, 2
      // Predicated region
      $region33: #{tpu_custom_call.1} parent=5 // pred_check
        %p316 = pneg %p315
      $region34: #{tpu_custom_call.1} parent=5 // pred_check_branch
        %318 = sbr.rel (%p316) target = $region36
      $region35: #{tpu_custom_call.1} parent=5 // pred_region
        // Predicated region
        $region37: #{tpu_custom_call.1} parent=35 // pred_check
          %p319 = pneg %p62
        $region38: #{tpu_custom_call.1} parent=35 // pred_check_branch
          %321 = sbr.rel (%p319) target = $region40
        $region39: #{tpu_custom_call.1} parent=35 // pred_region
          %s322 = sand.u32 %s52, 1
          %s323 = scalar_lea.sflag [#allocation3], %s322
          %s324 = sand.u32 %s52, 1
          %s325 = smul.addr %s324, 8
          %s326 = scalar_lea.vmem [#allocation2], %s325
          %s328 = ssub.s32 128, 128
          %329 = vsyncadd %s323, %s328
          %s330 = sadd.s32 %s36, %s35
          %s331 = smul.addr %s330, 128
          %s332 = scalar_lea.hbm %s0, %s331
          %s334 = sshll.u32 %s326, 4
          %s335 = int_to_ptr.vmem [resolvable:$true] %s334
          %337 = dma.hbm_to_vmem [thread:$0]  %s332, 128, %s335, %s323
        $region40: #{tpu_custom_call.1} parent=35 // pred_fallthru
          _
        // Predicated region
        $region41: #{tpu_custom_call.1} parent=35 // pred_check
          %p338 = pneg %p88
        $region42: #{tpu_custom_call.1} parent=35 // pred_check_branch
          %340 = sbr.rel (%p338) target = $region44
        $region43: #{tpu_custom_call.1} parent=35 // pred_region
          %s341 = sand.u32 %s28, 1
          %s342 = scalar_lea.sflag [#allocation6], %s341
          %s343 = sand.u32 %s78, 1
          %s344 = smul.addr %s343, 8
          %s345 = scalar_lea.vmem [#allocation5], %s344
          %s347 = ssub.s32 128, 128
          %348 = vsyncadd %s342, %s347
          %s349 = smul.addr %s35, 128
          %s350 = scalar_lea.hbm %s1, %s349
          %s352 = sshll.u32 %s345, 4
          %s353 = int_to_ptr.vmem [resolvable:$true] %s352
          %355 = dma.hbm_to_vmem [thread:$0]  %s350, 128, %s353, %s342
        $region44: #{tpu_custom_call.1} parent=35 // pred_fallthru
          _
      $region36: #{tpu_custom_call.1} parent=5 // pred_fallthru
        _
      %p356 = scmp.le.s32.totalorder 1, %s28
      %p357 = scmp.lt.s32.totalorder %s28, 3
      %p358 = pnand %p356, %p357
      %p359 = pneg %p358
      // Predicated region
      $region45: #{tpu_custom_call.1} parent=5 // pred_check
        _
      $region46: #{tpu_custom_call.1} parent=5 // pred_check_branch
        %361 = sbr.rel (%p358) target = $region48
      $region47: #{tpu_custom_call.1} parent=5 // pred_region
        %s362 = ssub.s32 %s28, 1
        %s363 = sand.u32 %s55, 1
        %s364 = scalar_lea.sflag [#allocation3], %s363
        %s365 = sand.u32 %s55, 1
        %s366 = smul.addr %s365, 8
        %s367 = scalar_lea.vmem [#allocation2], %s366
        // Predicated region
        $region49: #{tpu_custom_call.1} parent=47 // pred_check
          %p368 = pneg %p68
        $region50: #{tpu_custom_call.1} parent=47 // pred_check_branch
          %370 = sbr.rel (%p368) target = $region52
        $region51: #{tpu_custom_call.1} parent=47 // pred_region
          %371 = dma.done %s364, 128
        $region52: #{tpu_custom_call.1} parent=47 // pred_fallthru
          _
        %s372 = sand.u32 %s33, 1
        %s373 = scalar_lea.sflag [#allocation6], %s372
        %s374 = sand.u32 %s81, 1
        %s375 = smul.addr %s374, 8
        %s376 = scalar_lea.vmem [#allocation5], %s375
        // Predicated region
        $region53: #{tpu_custom_call.1} parent=47 // pred_check
          %p377 = pneg %p94
        $region54: #{tpu_custom_call.1} parent=47 // pred_check_branch
          %379 = sbr.rel (%p377) target = $region56
        $region55: #{tpu_custom_call.1} parent=47 // pred_region
          %380 = dma.done %s373, 128
        $region56: #{tpu_custom_call.1} parent=47 // pred_fallthru
          _
        // Predicated region
        $region57: #{tpu_custom_call.1} parent=47 // pred_check
          %p381 = pneg %p157
        $region58: #{tpu_custom_call.1} parent=47 // pred_check_branch
          %383 = sbr.rel (%p381) target = $region60
        $region59: #{tpu_custom_call.1} parent=47 // pred_region
          %384 = dma.done [#allocation6], 1024
        $region60: #{tpu_custom_call.1} parent=47 // pred_fallthru
          _
        // Predicated region
        $region61: #{tpu_custom_call.1} parent=47 // pred_check
          %p385 = pneg %p178
        $region62: #{tpu_custom_call.1} parent=47 // pred_check_branch
          %387 = sbr.rel (%p385) target = $region64
        $region63: #{tpu_custom_call.1} parent=47 // pred_region
          %388 = dma.done [#allocation9], 2048
        $region64: #{tpu_custom_call.1} parent=47 // pred_fallthru
          _
        // Predicated region
        $region65: #{tpu_custom_call.1} parent=47 // pred_check
          %p389 = pneg %p199
        $region66: #{tpu_custom_call.1} parent=47 // pred_check_branch
          %391 = sbr.rel (%p389) target = $region68
        $region67: #{tpu_custom_call.1} parent=47 // pred_region
          %392 = dma.done [#allocation9], 1024
        $region68: #{tpu_custom_call.1} parent=47 // pred_fallthru
          _
        %s393 = sand.u32 %s55, 1
        %s394 = scalar_lea.sflag [#allocation3], %s393
        %s395 = sand.u32 %s55, 1
        %s396 = smul.addr %s395, 8
        %s397 = scalar_lea.vmem [#allocation2], %s396
        %p398 = pneg %p68
        %p399 = pneg %p65
        %s400 = sand.u32 %s33, 1
        %s401 = scalar_lea.sflag [#allocation6], %s400
        %s402 = sand.u32 %s81, 1
        %s403 = smul.addr %s402, 8
        %s404 = scalar_lea.vmem [#allocation5], %s403
        %p405 = pneg %p94
        %p406 = pneg %p91
        %p407 = pneg %p115
        %p408 = pneg %p112
        %p409 = pneg %p136
        %p410 = pneg %p133
        %p411 = pneg %p157
        %p412 = pneg %p154
        %p413 = pneg %p178
        %p414 = pneg %p175
        %p415 = pneg %p199
        %p416 = pneg %p196
        %p417 = pneg %p227
        %p418 = pneg %p224
        %s419 = sand.u32 %s214, 1
        %s420 = scalar_lea.sflag [#allocation4], %s419
        %s421 = sand.u32 %s214, 1
        %s422 = smul.addr %s421, 8
        %s423 = scalar_lea.vmem [#allocation11], %s422
        %p424 = pneg %p255
        %p425 = pneg %p252
        %s426 = sand.u32 %s242, 1
        %s427 = scalar_lea.sflag [#allocation13], %s426
        %s428 = sand.u32 %s242, 1
        %s429 = smul.addr %s428, 16
        %s430 = scalar_lea.vmem [#allocation12], %s429
        %v432 = vld [vmem:[%s367] sm:$0xff]
        %v433 = vld [vmem:[%s376] sm:$0xff]
        %v434 = vpack.c.bf16 %v433, %v433
        %v435 = vld [vmem:[%s2] sm:$0x1]
        %v436 = vld [vmem:[%s3] sm:$0x1]
        %437 = vadd.xlane.f32.xlu0 %v432
        %v438 = vpop.xlane.xlu0 %437
        %v439 = vrcp.pop 128.0
        %v440 = vmul.f32 %v438, %v439
        %v441 = vsub.f32 %v432, %v440
        %v442 = vmul.f32 %v441, %v441
        %443 = vadd.xlane.f32.xlu0 %v442
        %v444 = vpop.xlane.xlu0 %443
        %v445 = vmul.f32 %v444, %v439
        %v446 = vadd.f32 %v445, 1e-06
        %v447 = vrsqrt.pop %v446
        %v448 = vmul.f32 %v441, %v447
        %v450 = vlaneseq
        %v451 = vshrl.u32 %v450, 7
        %v452 = vsub.s32 0, %v451
        %v453 = vrot.slane %v435, %v452
        %v455 = vmul.f32 %v448, %v453
        %v457 = vlaneseq
        %v458 = vshrl.u32 %v457, 7
        %v459 = vsub.s32 0, %v458
        %v460 = vrot.slane %v436, %v459
        %v462 = vadd.f32 %v455, %v460
        %v463 = vpack.c.bf16 %v462, %v462
        %v464 = vld [vmem:[#allocation7] sm:$0xf]
        %v465 = vld [vmem:[#allocation7 + $0x4] sm:$0xf]
        %v466 = vld [vmem:[#allocation7 + $0x8] sm:$0xf]
        %v467 = vld [vmem:[#allocation7 + $0xc] sm:$0xf]
        %v468 = vld [vmem:[#allocation7 + $0x10] sm:$0xf]
        %v469 = vld [vmem:[#allocation7 + $0x14] sm:$0xf]
        %v470 = vld [vmem:[#allocation7 + $0x18] sm:$0xf]
        %v471 = vld [vmem:[#allocation7 + $0x1c] sm:$0xf]
        %v472 = vld [vmem:[#allocation7 + $0x20] sm:$0xf]
        %v473 = vld [vmem:[#allocation7 + $0x24] sm:$0xf]
        %v474 = vld [vmem:[#allocation7 + $0x28] sm:$0xf]
        %v475 = vld [vmem:[#allocation7 + $0x2c] sm:$0xf]
        %v476 = vld [vmem:[#allocation7 + $0x30] sm:$0xf]
        %v477 = vld [vmem:[#allocation7 + $0x34] sm:$0xf]
        %v478 = vld [vmem:[#allocation7 + $0x38] sm:$0xf]
        %v479 = vld [vmem:[#allocation7 + $0x3c] sm:$0xf]
        %v496 = vunpack.c.l.b16 %v464
        %v497 = vunpack.c.l.b16 %v465
        %v498 = vunpack.c.l.b16 %v466
        %v499 = vunpack.c.l.b16 %v467
        %v500 = vunpack.c.l.b16 %v468
        %v501 = vunpack.c.l.b16 %v469
        %v502 = vunpack.c.l.b16 %v470
        %v503 = vunpack.c.l.b16 %v471
        %v504 = vunpack.c.l.b16 %v472
        %v505 = vunpack.c.l.b16 %v473
        %v506 = vunpack.c.l.b16 %v474
        %v507 = vunpack.c.l.b16 %v475
        %v508 = vunpack.c.l.b16 %v476
        %v509 = vunpack.c.l.b16 %v477
        %v510 = vunpack.c.l.b16 %v478
        %v511 = vunpack.c.l.b16 %v479
        %v512 = vpack.c.b16 %v497, %v496
        %v513 = vpack.c.b16 %v499, %v498
        %v514 = vpack.c.b16 %v501, %v500
        %v515 = vpack.c.b16 %v503, %v502
        %v516 = vpack.c.b16 %v505, %v504
        %v517 = vpack.c.b16 %v507, %v506
        %v518 = vpack.c.b16 %v509, %v508
        %v519 = vpack.c.b16 %v511, %v510
        %528 = vmatprep.subr.bf16.mxu0 0
        %529 = vmatpush1.bf16.msra.mxu0 %v512
        %530 = vmatprep.subr.bf16.mxu0 0
        %531 = vmatpush1.bf16.msra.mxu0 %v513
        %532 = vmatprep.subr.bf16.mxu0 0
        %533 = vmatpush1.bf16.msra.mxu0 %v514
        %534 = vmatprep.subr.bf16.mxu0 0
        %535 = vmatpush1.bf16.msra.mxu0 %v515
        %536 = vmatprep.subr.bf16.mxu0 0
        %537 = vmatpush1.bf16.msra.mxu0 %v516
        %538 = vmatprep.subr.bf16.mxu0 0
        %539 = vmatpush1.bf16.msra.mxu0 %v517
        %540 = vmatprep.subr.bf16.mxu0 0
        %541 = vmatpush1.bf16.msra.mxu0 %v518
        %542 = vmatprep.subr.bf16.mxu0 0
        %543 = vmatpush1.bf16.msra.mxu0 %v519
        %544 = vmatprep.subr.bf16.mxu0 0
        %545 = vmatpush1.bf16.msra.mxu0 0
        %546 = vmatprep.subr.bf16.mxu0 0
        %547 = vmatpush1.bf16.msra.mxu0 0
        %548 = vmatprep.subr.bf16.mxu0 0
        %549 = vmatpush1.bf16.msra.mxu0 0
        %550 = vmatprep.subr.bf16.mxu0 0
        %551 = vmatpush1.bf16.msra.mxu0 0
        %552 = vmatprep.subr.bf16.mxu0 0
        %553 = vmatpush1.bf16.msra.mxu0 0
        %554 = vmatprep.subr.bf16.mxu0 0
        %555 = vmatpush1.bf16.msra.mxu0 0
        %556 = vmatprep.subr.bf16.mxu0 0
        %557 = vmatpush1.bf16.msra.mxu0 0
        %558 = vmatprep.subr.bf16.mxu0 0
        %559 = vmatpush1.bf16.msra.mxu0 0
        %560 = vmatprep.mubr.bf16.mxu0 0
        %561 = vmatmul.mubr.bf16.gmra.mrb[0].mxu0 %v463
        %v562 = vpop.f32.mrb[0].mxu0
        %v563 = vadd.f32 0.0, %v562
        %v564 = vpop.f32.mrb[0].mxu0
        %v565 = vpop.f32.mrb[0].mxu0
        %v566 = vpop.f32.mrb[0].mxu0
        %567 = vdwg.mxu0
        %v568 = vpack.c.bf16 %v563, %v563
        %v569 = vld [vmem:[#allocation8] sm:$0xff]
        %v570 = vld [vmem:[#allocation8 + $0x8] sm:$0xff]
        %v571 = vld [vmem:[#allocation8 + $0x10] sm:$0xff]
        %v572 = vld [vmem:[#allocation8 + $0x18] sm:$0xff]
        %v573 = vld [vmem:[#allocation8 + $0x20] sm:$0xff]
        %v574 = vld [vmem:[#allocation8 + $0x28] sm:$0xff]
        %v575 = vld [vmem:[#allocation8 + $0x30] sm:$0xff]
        %v576 = vld [vmem:[#allocation8 + $0x38] sm:$0xff]
        %v577 = vld [vmem:[#allocation8 + $0x40] sm:$0xff]
        %v578 = vld [vmem:[#allocation8 + $0x48] sm:$0xff]
        %v579 = vld [vmem:[#allocation8 + $0x50] sm:$0xff]
        %v580 = vld [vmem:[#allocation8 + $0x58] sm:$0xff]
        %v581 = vld [vmem:[#allocation8 + $0x60] sm:$0xff]
        %v582 = vld [vmem:[#allocation8 + $0x68] sm:$0xff]
        %v583 = vld [vmem:[#allocation8 + $0x70] sm:$0xff]
        %v584 = vld [vmem:[#allocation8 + $0x78] sm:$0xff]
        %v601 = vunpack.c.l.b16 %v569
        %v602 = vunpack.c.h.b16 %v569
        %v603 = vunpack.c.l.b16 %v570
        %v604 = vunpack.c.h.b16 %v570
        %v605 = vunpack.c.l.b16 %v571
        %v606 = vunpack.c.h.b16 %v571
        %v607 = vunpack.c.l.b16 %v572
        %v608 = vunpack.c.h.b16 %v572
        %v609 = vunpack.c.l.b16 %v573
        %v610 = vunpack.c.h.b16 %v573
        %v611 = vunpack.c.l.b16 %v574
        %v612 = vunpack.c.h.b16 %v574
        %v613 = vunpack.c.l.b16 %v575
        %v614 = vunpack.c.h.b16 %v575
        %v615 = vunpack.c.l.b16 %v576
        %v616 = vunpack.c.h.b16 %v576
        %v617 = vunpack.c.l.b16 %v577
        %v618 = vunpack.c.h.b16 %v577
        %v619 = vunpack.c.l.b16 %v578
        %v620 = vunpack.c.h.b16 %v578
        %v621 = vunpack.c.l.b16 %v579
        %v622 = vunpack.c.h.b16 %v579
        %v623 = vunpack.c.l.b16 %v580
        %v624 = vunpack.c.h.b16 %v580
        %v625 = vunpack.c.l.b16 %v581
        %v626 = vunpack.c.h.b16 %v581
        %v627 = vunpack.c.l.b16 %v582
        %v628 = vunpack.c.h.b16 %v582
        %v629 = vunpack.c.l.b16 %v583
        %v630 = vunpack.c.h.b16 %v583
        %v631 = vunpack.c.l.b16 %v584
        %v632 = vunpack.c.h.b16 %v584
        %v633 = vpack.c.b16 %v603, %v601
        %v634 = vpack.c.b16 %v604, %v602
        %v635 = vpack.c.b16 %v607, %v605
        %v636 = vpack.c.b16 %v608, %v606
        %v637 = vpack.c.b16 %v611, %v609
        %v638 = vpack.c.b16 %v612, %v610
        %v639 = vpack.c.b16 %v615, %v613
        %v640 = vpack.c.b16 %v616, %v614
        %v641 = vpack.c.b16 %v619, %v617
        %v642 = vpack.c.b16 %v620, %v618
        %v643 = vpack.c.b16 %v623, %v621
        %v644 = vpack.c.b16 %v624, %v622
        %v645 = vpack.c.b16 %v627, %v625
        %v646 = vpack.c.b16 %v628, %v626
        %v647 = vpack.c.b16 %v631, %v629
        %v648 = vpack.c.b16 %v632, %v630
        %665 = vmatprep.subr.bf16.mxu0 %v634
        %666 = vmatpush1.bf16.msra.mxu0 %v633
        %667 = vmatprep.subr.bf16.mxu0 %v636
        %668 = vmatpush1.bf16.msra.mxu0 %v635
        %669 = vmatprep.subr.bf16.mxu0 %v638
        %670 = vmatpush1.bf16.msra.mxu0 %v637
        %671 = vmatprep.subr.bf16.mxu0 %v640
        %672 = vmatpush1.bf16.msra.mxu0 %v639
        %673 = vmatprep.subr.bf16.mxu0 %v642
        %674 = vmatpush1.bf16.msra.mxu0 %v641
        %675 = vmatprep.subr.bf16.mxu0 %v644
        %676 = vmatpush1.bf16.msra.mxu0 %v643
        %677 = vmatprep.subr.bf16.mxu0 %v646
        %678 = vmatpush1.bf16.msra.mxu0 %v645
        %679 = vmatprep.subr.bf16.mxu0 %v648
        %680 = vmatpush1.bf16.msra.mxu0 %v647
        %681 = vmatprep.subr.bf16.mxu0 0
        %682 = vmatpush1.bf16.msra.mxu0 0
        %683 = vmatprep.subr.bf16.mxu0 0
        %684 = vmatpush1.bf16.msra.mxu0 0
        %685 = vmatprep.subr.bf16.mxu0 0
        %686 = vmatpush1.bf16.msra.mxu0 0
        %687 = vmatprep.subr.bf16.mxu0 0
        %688 = vmatpush1.bf16.msra.mxu0 0
        %689 = vmatprep.subr.bf16.mxu0 0
        %690 = vmatpush1.bf16.msra.mxu0 0
        %691 = vmatprep.subr.bf16.mxu0 0
        %692 = vmatpush1.bf16.msra.mxu0 0
        %693 = vmatprep.subr.bf16.mxu0 0
        %694 = vmatpush1.bf16.msra.mxu0 0
        %695 = vmatprep.subr.bf16.mxu0 0
        %696 = vmatpush1.bf16.msra.mxu0 0
        %697 = vmatprep.mubr.bf16.mxu0 0
        %698 = vmatmul.mubr.bf16.gmra.mrb[0].mxu0 %v434
        %v699 = vpop.f32.mrb[0].mxu0
        %v700 = vadd.f32 0.0, %v699
        %v701 = vpop.f32.mrb[0].mxu0
        %v702 = vadd.f32 0.0, %v701
        %v703 = vpop.f32.mrb[0].mxu0
        %v704 = vpop.f32.mrb[0].mxu0
        %705 = vdwg.mxu0
        %v706 = vpack.c.bf16 %v700, %v700
        %v707 = vpack.c.bf16 %v702, %v702
        %vm708 = vcmask 261120
        %v710 = vsel %vm708, %v568, 0
        %v713 = vsel %vm708, %v706, 0
        %715 = vmatprep.subr.bf16.mxu0 0
        %716 = vmatpush1.bf16.xpose.msra.mxu0 %v713
        %717 = vmatprep.subr.bf16.mxu0 0
        %718 = vmatpush1.bf16.xpose.msra.mxu0 0
        %719 = vmatprep.subr.bf16.mxu0 0
        %720 = vmatpush1.bf16.xpose.msra.mxu0 0
        %721 = vmatprep.subr.bf16.mxu0 0
        %722 = vmatpush1.bf16.xpose.msra.mxu0 0
        %723 = vmatprep.subr.bf16.mxu0 0
        %724 = vmatpush1.bf16.xpose.msra.mxu0 0
        %725 = vmatprep.subr.bf16.mxu0 0
        %726 = vmatpush1.bf16.xpose.msra.mxu0 0
        %727 = vmatprep.subr.bf16.mxu0 0
        %728 = vmatpush1.bf16.xpose.msra.mxu0 0
        %729 = vmatprep.subr.bf16.mxu0 0
        %730 = vmatpush1.bf16.xpose.msra.mxu0 0
        %731 = vmatprep.subr.bf16.mxu0 0
        %732 = vmatpush1.bf16.xpose.msra.mxu0 0
        %733 = vmatprep.subr.bf16.mxu0 0
        %734 = vmatpush1.bf16.xpose.msra.mxu0 0
        %735 = vmatprep.subr.bf16.mxu0 0
        %736 = vmatpush1.bf16.xpose.msra.mxu0 0
        %737 = vmatprep.subr.bf16.mxu0 0
        %738 = vmatpush1.bf16.xpose.msra.mxu0 0
        %739 = vmatprep.subr.bf16.mxu0 0
        %740 = vmatpush1.bf16.xpose.msra.mxu0 0
        %741 = vmatprep.subr.bf16.mxu0 0
        %742 = vmatpush1.bf16.xpose.msra.mxu0 0
        %743 = vmatprep.subr.bf16.mxu0 0
        %744 = vmatpush1.bf16.xpose.msra.mxu0 0
        %745 = vmatprep.subr.bf16.mxu0 0
        %746 = vmatpush1.bf16.xpose.msra.mxu0 0
        %747 = vmatprep.mubr.bf16.mxu0 0
        %748 = vmatmul.mubr.bf16.gmra.mrb[0].mxu0 %v710
        %v749 = vpop.f32.mrb[0].mxu0
        %v750 = vadd.f32 0.0, %v749
        %v751 = vpop.f32.mrb[0].mxu0
        %v752 = vpop.f32.mrb[0].mxu0
        %v753 = vpop.f32.mrb[0].mxu0
        %754 = vdwg.mxu0
        %vm755 = vcmask 64512
        %v756 = vsel %vm755, %v750, -inf
        %757 = vmax.xlane.f32.xlu0 %v756
        %v758 = vpop.xlane.xlu0 %757
        %v759 = vsub.f32 %v750, %v758
        %v760 = vmul.f32 %v759, 1.442695
        %v761 = vpow.pop %v760
        %v762 = vsel %vm755, %v761, 0.0
        %763 = vadd.xlane.f32.xlu0 %v762
        %v764 = vpop.xlane.xlu0 %763
        %v765 = vrcp.pop %v764
        %v766 = vmul.f32 %v761, %v765
        %v767 = vsel %vm755, %v766, 0.0
        %v768 = vpack.c.bf16 %v767, %v767
        %769 = vst [vmem:[%s430] sm:$0xf] %v768
        %v770 = vpack.c.bf16 %v766, %v766
        %v772 = vsel %vm755, %v770, 0
        %vm774 = vcmask 1043456
        %v776 = vsel %vm774, %v707, 0
        %778 = vmatprep.subr.bf16.mxu0 0
        %779 = vmatpush1.bf16.msra.mxu0 %v776
        %780 = vmatprep.subr.bf16.mxu0 0
        %781 = vmatpush1.bf16.msra.mxu0 0
        %782 = vmatprep.subr.bf16.mxu0 0
        %783 = vmatpush1.bf16.msra.mxu0 0
        %784 = vmatprep.subr.bf16.mxu0 0
        %785 = vmatpush1.bf16.msra.mxu0 0
        %786 = vmatprep.subr.bf16.mxu0 0
        %787 = vmatpush1.bf16.msra.mxu0 0
        %788 = vmatprep.subr.bf16.mxu0 0
        %789 = vmatpush1.bf16.msra.mxu0 0
        %790 = vmatprep.subr.bf16.mxu0 0
        %791 = vmatpush1.bf16.msra.mxu0 0
        %792 = vmatprep.subr.bf16.mxu0 0
        %793 = vmatpush1.bf16.msra.mxu0 0
        %794 = vmatprep.subr.bf16.mxu0 0
        %795 = vmatpush1.bf16.msra.mxu0 0
        %796 = vmatprep.subr.bf16.mxu0 0
        %797 = vmatpush1.bf16.msra.mxu0 0
        %798 = vmatprep.subr.bf16.mxu0 0
        %799 = vmatpush1.bf16.msra.mxu0 0
        %800 = vmatprep.subr.bf16.mxu0 0
        %801 = vmatpush1.bf16.msra.mxu0 0
        %802 = vmatprep.subr.bf16.mxu0 0
        %803 = vmatpush1.bf16.msra.mxu0 0
        %804 = vmatprep.subr.bf16.mxu0 0
        %805 = vmatpush1.bf16.msra.mxu0 0
        %806 = vmatprep.subr.bf16.mxu0 0
        %807 = vmatpush1.bf16.msra.mxu0 0
        %808 = vmatprep.subr.bf16.mxu0 0
        %809 = vmatpush1.bf16.msra.mxu0 0
        %810 = vmatprep.mubr.bf16.mxu0 0
        %811 = vmatmul.mubr.bf16.gmra.mrb[0].mxu0 %v772
        %v812 = vpop.f32.mrb[0].mxu0
        %v813 = vadd.f32 0.0, %v812
        %v814 = vpop.f32.mrb[0].mxu0
        %v815 = vpop.f32.mrb[0].mxu0
        %v816 = vpop.f32.mrb[0].mxu0
        %817 = vdwg.mxu0
        %v818 = vpack.c.bf16 %v813, %v813
        %820 = vrot.lane.b32.xlu0 %v568, 96
        %v821 = vpop.permute.xlu0 %820
        %823 = vrot.lane.b32.xlu0 %v706, 96
        %v824 = vpop.permute.xlu0 %823
        %v826 = vsel %vm708, %v821, 0
        %v829 = vsel %vm708, %v824, 0
        %831 = vmatprep.subr.bf16.mxu0 0
        %832 = vmatpush1.bf16.xpose.msra.mxu0 %v829
        %833 = vmatprep.subr.bf16.mxu0 0
        %834 = vmatpush1.bf16.xpose.msra.mxu0 0
        %835 = vmatprep.subr.bf16.mxu0 0
        %836 = vmatpush1.bf16.xpose.msra.mxu0 0
        %837 = vmatprep.subr.bf16.mxu0 0
        %838 = vmatpush1.bf16.xpose.msra.mxu0 0
        %839 = vmatprep.subr.bf16.mxu0 0
        %840 = vmatpush1.bf16.xpose.msra.mxu0 0
        %841 = vmatprep.subr.bf16.mxu0 0
        %842 = vmatpush1.bf16.xpose.msra.mxu0 0
        %843 = vmatprep.subr.bf16.mxu0 0
        %844 = vmatpush1.bf16.xpose.msra.mxu0 0
        %845 = vmatprep.subr.bf16.mxu0 0
        %846 = vmatpush1.bf16.xpose.msra.mxu0 0
        %847 = vmatprep.subr.bf16.mxu0 0
        %848 = vmatpush1.bf16.xpose.msra.mxu0 0
        %849 = vmatprep.subr.bf16.mxu0 0
        %850 = vmatpush1.bf16.xpose.msra.mxu0 0
        %851 = vmatprep.subr.bf16.mxu0 0
        %852 = vmatpush1.bf16.xpose.msra.mxu0 0
        %853 = vmatprep.subr.bf16.mxu0 0
        %854 = vmatpush1.bf16.xpose.msra.mxu0 0
        %855 = vmatprep.subr.bf16.mxu0 0
        %856 = vmatpush1.bf16.xpose.msra.mxu0 0
        %857 = vmatprep.subr.bf16.mxu0 0
        %858 = vmatpush1.bf16.xpose.msra.mxu0 0
        %859 = vmatprep.subr.bf16.mxu0 0
        %860 = vmatpush1.bf16.xpose.msra.mxu0 0
        %861 = vmatprep.subr.bf16.mxu0 0
        %862 = vmatpush1.bf16.xpose.msra.mxu0 0
        %863 = vmatprep.mubr.bf16.mxu0 0
        %864 = vmatmul.mubr.bf16.gmra.mrb[0].mxu0 %v826
        %v865 = vpop.f32.mrb[0].mxu0
        %v866 = vadd.f32 0.0, %v865
        %v867 = vpop.f32.mrb[0].mxu0
        %v868 = vpop.f32.mrb[0].mxu0
        %v869 = vpop.f32.mrb[0].mxu0
        %870 = vdwg.mxu0
        %v871 = vsel %vm755, %v866, -inf
        %872 = vmax.xlane.f32.xlu0 %v871
        %v873 = vpop.xlane.xlu0 %872
        %v874 = vsub.f32 %v866, %v873
        %v875 = vmul.f32 %v874, 1.442695
        %v876 = vpow.pop %v875
        %v877 = vsel %vm755, %v876, 0.0
        %878 = vadd.xlane.f32.xlu0 %v877
        %v879 = vpop.xlane.xlu0 %878
        %v880 = vrcp.pop %v879
        %v881 = vmul.f32 %v876, %v880
        %v882 = vsel %vm755, %v881, 0.0
        %v883 = vpack.c.bf16 %v882, %v882
        %s884 = scalar_lea.vmem %s430, 4 [#allocation12]
        %885 = vst [vmem:[%s884] sm:$0xf] %v883
        %v886 = vpack.c.bf16 %v881, %v881
        %888 = vrot.lane.b32.xlu0 %v707, 96
        %v889 = vpop.permute.xlu0 %888
        %v891 = vsel %vm755, %v886, 0
        %v894 = vsel %vm774, %v889, 0
        %896 = vmatprep.subr.bf16.mxu0 0
        %897 = vmatpush1.bf16.msra.mxu0 %v894
        %898 = vmatprep.subr.bf16.mxu0 0
        %899 = vmatpush1.bf16.msra.mxu0 0
        %900 = vmatprep.subr.bf16.mxu0 0
        %901 = vmatpush1.bf16.msra.mxu0 0
        %902 = vmatprep.subr.bf16.mxu0 0
        %903 = vmatpush1.bf16.msra.mxu0 0
        %904 = vmatprep.subr.bf16.mxu0 0
        %905 = vmatpush1.bf16.msra.mxu0 0
        %906 = vmatprep.subr.bf16.mxu0 0
        %907 = vmatpush1.bf16.msra.mxu0 0
        %908 = vmatprep.subr.bf16.mxu0 0
        %909 = vmatpush1.bf16.msra.mxu0 0
        %910 = vmatprep.subr.bf16.mxu0 0
        %911 = vmatpush1.bf16.msra.mxu0 0
        %912 = vmatprep.subr.bf16.mxu0 0
        %913 = vmatpush1.bf16.msra.mxu0 0
        %914 = vmatprep.subr.bf16.mxu0 0
        %915 = vmatpush1.bf16.msra.mxu0 0
        %916 = vmatprep.subr.bf16.mxu0 0
        %917 = vmatpush1.bf16.msra.mxu0 0
        %918 = vmatprep.subr.bf16.mxu0 0
        %919 = vmatpush1.bf16.msra.mxu0 0
        %920 = vmatprep.subr.bf16.mxu0 0
        %921 = vmatpush1.bf16.msra.mxu0 0
        %922 = vmatprep.subr.bf16.mxu0 0
        %923 = vmatpush1.bf16.msra.mxu0 0
        %924 = vmatprep.subr.bf16.mxu0 0
        %925 = vmatpush1.bf16.msra.mxu0 0
        %926 = vmatprep.subr.bf16.mxu0 0
        %927 = vmatpush1.bf16.msra.mxu0 0
        %928 = vmatprep.mubr.bf16.mxu0 0
        %929 = vmatmul.mubr.bf16.gmra.mrb[0].mxu0 %v891
        %v930 = vpop.f32.mrb[0].mxu0
        %v931 = vadd.f32 0.0, %v930
        %v932 = vpop.f32.mrb[0].mxu0
        %v933 = vpop.f32.mrb[0].mxu0
        %v934 = vpop.f32.mrb[0].mxu0
        %935 = vdwg.mxu0
        %v936 = vpack.c.bf16 %v931, %v931
        %937 = vrot.lane.b32.xlu0 %v568, 64
        %v938 = vpop.permute.xlu0 %937
        %939 = vrot.lane.b32.xlu0 %v706, 64
        %v940 = vpop.permute.xlu0 %939
        %v942 = vsel %vm708, %v938, 0
        %v945 = vsel %vm708, %v940, 0
        %947 = vmatprep.subr.bf16.mxu0 0
        %948 = vmatpush1.bf16.xpose.msra.mxu0 %v945
        %949 = vmatprep.subr.bf16.mxu0 0
        %950 = vmatpush1.bf16.xpose.msra.mxu0 0
        %951 = vmatprep.subr.bf16.mxu0 0
        %952 = vmatpush1.bf16.xpose.msra.mxu0 0
        %953 = vmatprep.subr.bf16.mxu0 0
        %954 = vmatpush1.bf16.xpose.msra.mxu0 0
        %955 = vmatprep.subr.bf16.mxu0 0
        %956 = vmatpush1.bf16.xpose.msra.mxu0 0
        %957 = vmatprep.subr.bf16.mxu0 0
        %958 = vmatpush1.bf16.xpose.msra.mxu0 0
        %959 = vmatprep.subr.bf16.mxu0 0
        %960 = vmatpush1.bf16.xpose.msra.mxu0 0
        %961 = vmatprep.subr.bf16.mxu0 0
        %962 = vmatpush1.bf16.xpose.msra.mxu0 0
        %963 = vmatprep.subr.bf16.mxu0 0
        %964 = vmatpush1.bf16.xpose.msra.mxu0 0
        %965 = vmatprep.subr.bf16.mxu0 0
        %966 = vmatpush1.bf16.xpose.msra.mxu0 0
        %967 = vmatprep.subr.bf16.mxu0 0
        %968 = vmatpush1.bf16.xpose.msra.mxu0 0
        %969 = vmatprep.subr.bf16.mxu0 0
        %970 = vmatpush1.bf16.xpose.msra.mxu0 0
        %971 = vmatprep.subr.bf16.mxu0 0
        %972 = vmatpush1.bf16.xpose.msra.mxu0 0
        %973 = vmatprep.subr.bf16.mxu0 0
        %974 = vmatpush1.bf16.xpose.msra.mxu0 0
        %975 = vmatprep.subr.bf16.mxu0 0
        %976 = vmatpush1.bf16.xpose.msra.mxu0 0
        %977 = vmatprep.subr.bf16.mxu0 0
        %978 = vmatpush1.bf16.xpose.msra.mxu0 0
        %979 = vmatprep.mubr.bf16.mxu0 0
        %980 = vmatmul.mubr.bf16.gmra.mrb[0].mxu0 %v942
        %v981 = vpop.f32.mrb[0].mxu0
        %v982 = vadd.f32 0.0, %v981
        %v983 = vpop.f32.mrb[0].mxu0
        %v984 = vpop.f32.mrb[0].mxu0
        %v985 = vpop.f32.mrb[0].mxu0
        %986 = vdwg.mxu0
        %v987 = vsel %vm755, %v982, -inf
        %988 = vmax.xlane.f32.xlu0 %v987
        %v989 = vpop.xlane.xlu0 %988
        %v990 = vsub.f32 %v982, %v989
        %v991 = vmul.f32 %v990, 1.442695
        %v992 = vpow.pop %v991
        %v993 = vsel %vm755, %v992, 0.0
        %994 = vadd.xlane.f32.xlu0 %v993
        %v995 = vpop.xlane.xlu0 %994
        %v996 = vrcp.pop %v995
        %v997 = vmul.f32 %v992, %v996
        %v998 = vsel %vm755, %v997, 0.0
        %v999 = vpack.c.bf16 %v998, %v998
        %s1000 = scalar_lea.vmem %s430, 8 [#allocation12]
        %1001 = vst [vmem:[%s1000] sm:$0xf] %v999
        %v1002 = vpack.c.bf16 %v997, %v997
        %1003 = vrot.lane.b32.xlu0 %v707, 64
        %v1004 = vpop.permute.xlu0 %1003
        %v1006 = vsel %vm755, %v1002, 0
        %v1009 = vsel %vm774, %v1004, 0
        %1011 = vmatprep.subr.bf16.mxu0 0
        %1012 = vmatpush1.bf16.msra.mxu0 %v1009
        %1013 = vmatprep.subr.bf16.mxu0 0
        %1014 = vmatpush1.bf16.msra.mxu0 0
        %1015 = vmatprep.subr.bf16.mxu0 0
        %1016 = vmatpush1.bf16.msra.mxu0 0
        %1017 = vmatprep.subr.bf16.mxu0 0
        %1018 = vmatpush1.bf16.msra.mxu0 0
        %1019 = vmatprep.subr.bf16.mxu0 0
        %1020 = vmatpush1.bf16.msra.mxu0 0
        %1021 = vmatprep.subr.bf16.mxu0 0
        %1022 = vmatpush1.bf16.msra.mxu0 0
        %1023 = vmatprep.subr.bf16.mxu0 0
        %1024 = vmatpush1.bf16.msra.mxu0 0
        %1025 = vmatprep.subr.bf16.mxu0 0
        %1026 = vmatpush1.bf16.msra.mxu0 0
        %1027 = vmatprep.subr.bf16.mxu0 0
        %1028 = vmatpush1.bf16.msra.mxu0 0
        %1029 = vmatprep.subr.bf16.mxu0 0
        %1030 = vmatpush1.bf16.msra.mxu0 0
        %1031 = vmatprep.subr.bf16.mxu0 0
        %1032 = vmatpush1.bf16.msra.mxu0 0
        %1033 = vmatprep.subr.bf16.mxu0 0
        %1034 = vmatpush1.bf16.msra.mxu0 0
        %1035 = vmatprep.subr.bf16.mxu0 0
        %1036 = vmatpush1.bf16.msra.mxu0 0
        %1037 = vmatprep.subr.bf16.mxu0 0
        %1038 = vmatpush1.bf16.msra.mxu0 0
        %1039 = vmatprep.subr.bf16.mxu0 0
        %1040 = vmatpush1.bf16.msra.mxu0 0
        %1041 = vmatprep.subr.bf16.mxu0 0
        %1042 = vmatpush1.bf16.msra.mxu0 0
        %1043 = vmatprep.mubr.bf16.mxu0 0
        %1044 = vmatmul.mubr.bf16.gmra.mrb[0].mxu0 %v1006
        %v1045 = vpop.f32.mrb[0].mxu0
        %v1046 = vadd.f32 0.0, %v1045
        %v1047 = vpop.f32.mrb[0].mxu0
        %v1048 = vpop.f32.mrb[0].mxu0
        %v1049 = vpop.f32.mrb[0].mxu0
        %1050 = vdwg.mxu0
        %v1051 = vpack.c.bf16 %v1046, %v1046
        %1052 = vrot.lane.b32.xlu0 %v568, 32
        %v1053 = vpop.permute.xlu0 %1052
        %1054 = vrot.lane.b32.xlu0 %v706, 32
        %v1055 = vpop.permute.xlu0 %1054
        %v1057 = vsel %vm708, %v1053, 0
        %v1060 = vsel %vm708, %v1055, 0
        %1062 = vmatprep.subr.bf16.mxu0 0
        %1063 = vmatpush1.bf16.xpose.msra.mxu0 %v1060
        %1064 = vmatprep.subr.bf16.mxu0 0
        %1065 = vmatpush1.bf16.xpose.msra.mxu0 0
        %1066 = vmatprep.subr.bf16.mxu0 0
        %1067 = vmatpush1.bf16.xpose.msra.mxu0 0
        %1068 = vmatprep.subr.bf16.mxu0 0
        %1069 = vmatpush1.bf16.xpose.msra.mxu0 0
        %1070 = vmatprep.subr.bf16.mxu0 0
        %1071 = vmatpush1.bf16.xpose.msra.mxu0 0
        %1072 = vmatprep.subr.bf16.mxu0 0
        %1073 = vmatpush1.bf16.xpose.msra.mxu0 0
        %1074 = vmatprep.subr.bf16.mxu0 0
        %1075 = vmatpush1.bf16.xpose.msra.mxu0 0
        %1076 = vmatprep.subr.bf16.mxu0 0
        %1077 = vmatpush1.bf16.xpose.msra.mxu0 0
        %1078 = vmatprep.subr.bf16.mxu0 0
        %1079 = vmatpush1.bf16.xpose.msra.mxu0 0
        %1080 = vmatprep.subr.bf16.mxu0 0
        %1081 = vmatpush1.bf16.xpose.msra.mxu0 0
        %1082 = vmatprep.subr.bf16.mxu0 0
        %1083 = vmatpush1.bf16.xpose.msra.mxu0 0
        %1084 = vmatprep.subr.bf16.mxu0 0
        %1085 = vmatpush1.bf16.xpose.msra.mxu0 0
        %1086 = vmatprep.subr.bf16.mxu0 0
        %1087 = vmatpush1.bf16.xpose.msra.mxu0 0
        %1088 = vmatprep.subr.bf16.mxu0 0
        %1089 = vmatpush1.bf16.xpose.msra.mxu0 0
        %1090 = vmatprep.subr.bf16.mxu0 0
        %1091 = vmatpush1.bf16.xpose.msra.mxu0 0
        %1092 = vmatprep.subr.bf16.mxu0 0
        %1093 = vmatpush1.bf16.xpose.msra.mxu0 0
        %1094 = vmatprep.mubr.bf16.mxu0 0
        %1095 = vmatmul.mubr.bf16.gmra.mrb[0].mxu0 %v1057
        %v1096 = vpop.f32.mrb[0].mxu0
        %v1097 = vadd.f32 0.0, %v1096
        %v1098 = vpop.f32.mrb[0].mxu0
        %v1099 = vpop.f32.mrb[0].mxu0
        %v1100 = vpop.f32.mrb[0].mxu0
        %1101 = vdwg.mxu0
        %v1102 = vsel %vm755, %v1097, -inf
        %1103 = vmax.xlane.f32.xlu0 %v1102
        %v1104 = vpop.xlane.xlu0 %1103
        %v1105 = vsub.f32 %v1097, %v1104
        %v1106 = vmul.f32 %v1105, 1.442695
        %v1107 = vpow.pop %v1106
        %v1108 = vsel %vm755, %v1107, 0.0
        %1109 = vadd.xlane.f32.xlu0 %v1108
        %v1110 = vpop.xlane.xlu0 %1109
        %v1111 = vrcp.pop %v1110
        %v1112 = vmul.f32 %v1107, %v1111
        %v1113 = vsel %vm755, %v1112, 0.0
        %v1114 = vpack.c.bf16 %v1113, %v1113
        %s1115 = scalar_lea.vmem %s430, 12 [#allocation12]
        %1116 = vst [vmem:[%s1115] sm:$0xf] %v1114
        %v1117 = vpack.c.bf16 %v1112, %v1112
        %1118 = vrot.lane.b32.xlu0 %v707, 32
        %v1119 = vpop.permute.xlu0 %1118
        %v1121 = vsel %vm755, %v1117, 0
        %v1124 = vsel %vm774, %v1119, 0
        %1126 = vmatprep.subr.bf16.mxu0 0
        %1127 = vmatpush1.bf16.msra.mxu0 %v1124
        %1128 = vmatprep.subr.bf16.mxu0 0
        %1129 = vmatpush1.bf16.msra.mxu0 0
        %1130 = vmatprep.subr.bf16.mxu0 0
        %1131 = vmatpush1.bf16.msra.mxu0 0
        %1132 = vmatprep.subr.bf16.mxu0 0
        %1133 = vmatpush1.bf16.msra.mxu0 0
        %1134 = vmatprep.subr.bf16.mxu0 0
        %1135 = vmatpush1.bf16.msra.mxu0 0
        %1136 = vmatprep.subr.bf16.mxu0 0
        %1137 = vmatpush1.bf16.msra.mxu0 0
        %1138 = vmatprep.subr.bf16.mxu0 0
        %1139 = vmatpush1.bf16.msra.mxu0 0
        %1140 = vmatprep.subr.bf16.mxu0 0
        %1141 = vmatpush1.bf16.msra.mxu0 0
        %1142 = vmatprep.subr.bf16.mxu0 0
        %1143 = vmatpush1.bf16.msra.mxu0 0
        %1144 = vmatprep.subr.bf16.mxu0 0
        %1145 = vmatpush1.bf16.msra.mxu0 0
        %1146 = vmatprep.subr.bf16.mxu0 0
        %1147 = vmatpush1.bf16.msra.mxu0 0
        %1148 = vmatprep.subr.bf16.mxu0 0
        %1149 = vmatpush1.bf16.msra.mxu0 0
        %1150 = vmatprep.subr.bf16.mxu0 0
        %1151 = vmatpush1.bf16.msra.mxu0 0
        %1152 = vmatprep.subr.bf16.mxu0 0
        %1153 = vmatpush1.bf16.msra.mxu0 0
        %1154 = vmatprep.subr.bf16.mxu0 0
        %1155 = vmatpush1.bf16.msra.mxu0 0
        %1156 = vmatprep.subr.bf16.mxu0 0
        %1157 = vmatpush1.bf16.msra.mxu0 0
        %1158 = vmatprep.mubr.bf16.mxu0 0
        %1159 = vmatmul.mubr.bf16.gmra.mrb[0].mxu0 %v1121
        %v1160 = vpop.f32.mrb[0].mxu0
        %v1161 = vadd.f32 0.0, %v1160
        %v1162 = vpop.f32.mrb[0].mxu0
        %v1163 = vpop.f32.mrb[0].mxu0
        %v1164 = vpop.f32.mrb[0].mxu0
        %1165 = vdwg.mxu0
        %v1166 = vpack.c.bf16 %v1161, %v1161
        %1168 = vrot.lane.b32.xlu0 %v936, 32
        %v1169 = vpop.permute.xlu0 %1168
        %1171 = vrot.lane.b32.xlu0 %v1051, 64
        %v1172 = vpop.permute.xlu0 %1171
        %1174 = vrot.lane.b32.xlu0 %v1166, 96
        %v1175 = vpop.permute.xlu0 %1174
        %v1178 = vsel %vm708, %v818, %v1169
        %vm1179 = vcmask 523264
        %v1181 = vsel %vm1179, %v1178, %v1172
        %vm1182 = vcmask 785408
        %v1184 = vsel %vm1182, %v1181, %v1175
        %v1186 = vld [vmem:[#allocation10] sm:$0xf]
        %v1187 = vld [vmem:[#allocation10 + $0x4] sm:$0xf]
        %v1188 = vld [vmem:[#allocation10 + $0x8] sm:$0xf]
        %v1189 = vld [vmem:[#allocation10 + $0xc] sm:$0xf]
        %v1190 = vld [vmem:[#allocation10 + $0x10] sm:$0xf]
        %v1191 = vld [vmem:[#allocation10 + $0x14] sm:$0xf]
        %v1192 = vld [vmem:[#allocation10 + $0x18] sm:$0xf]
        %v1193 = vld [vmem:[#allocation10 + $0x1c] sm:$0xf]
        %v1194 = vld [vmem:[#allocation10 + $0x20] sm:$0xf]
        %v1195 = vld [vmem:[#allocation10 + $0x24] sm:$0xf]
        %v1196 = vld [vmem:[#allocation10 + $0x28] sm:$0xf]
        %v1197 = vld [vmem:[#allocation10 + $0x2c] sm:$0xf]
        %v1198 = vld [vmem:[#allocation10 + $0x30] sm:$0xf]
        %v1199 = vld [vmem:[#allocation10 + $0x34] sm:$0xf]
        %v1200 = vld [vmem:[#allocation10 + $0x38] sm:$0xf]
        %v1201 = vld [vmem:[#allocation10 + $0x3c] sm:$0xf]
        %v1218 = vunpack.c.l.b16 %v1186
        %v1219 = vunpack.c.l.b16 %v1187
        %v1220 = vunpack.c.l.b16 %v1188
        %v1221 = vunpack.c.l.b16 %v1189
        %v1222 = vunpack.c.l.b16 %v1190
        %v1223 = vunpack.c.l.b16 %v1191
        %v1224 = vunpack.c.l.b16 %v1192
        %v1225 = vunpack.c.l.b16 %v1193
        %v1226 = vunpack.c.l.b16 %v1194
        %v1227 = vunpack.c.l.b16 %v1195
        %v1228 = vunpack.c.l.b16 %v1196
        %v1229 = vunpack.c.l.b16 %v1197
        %v1230 = vunpack.c.l.b16 %v1198
        %v1231 = vunpack.c.l.b16 %v1199
        %v1232 = vunpack.c.l.b16 %v1200
        %v1233 = vunpack.c.l.b16 %v1201
        %v1234 = vpack.c.b16 %v1219, %v1218
        %v1235 = vpack.c.b16 %v1221, %v1220
        %v1236 = vpack.c.b16 %v1223, %v1222
        %v1237 = vpack.c.b16 %v1225, %v1224
        %v1238 = vpack.c.b16 %v1227, %v1226
        %v1239 = vpack.c.b16 %v1229, %v1228
        %v1240 = vpack.c.b16 %v1231, %v1230
        %v1241 = vpack.c.b16 %v1233, %v1232
        %1250 = vmatprep.subr.bf16.mxu0 0
        %1251 = vmatpush1.bf16.msra.mxu0 %v1234
        %1252 = vmatprep.subr.bf16.mxu0 0
        %1253 = vmatpush1.bf16.msra.mxu0 %v1235
        %1254 = vmatprep.subr.bf16.mxu0 0
        %1255 = vmatpush1.bf16.msra.mxu0 %v1236
        %1256 = vmatprep.subr.bf16.mxu0 0
        %1257 = vmatpush1.bf16.msra.mxu0 %v1237
        %1258 = vmatprep.subr.bf16.mxu0 0
        %1259 = vmatpush1.bf16.msra.mxu0 %v1238
        %1260 = vmatprep.subr.bf16.mxu0 0
        %1261 = vmatpush1.bf16.msra.mxu0 %v1239
        %1262 = vmatprep.subr.bf16.mxu0 0
        %1263 = vmatpush1.bf16.msra.mxu0 %v1240
        %1264 = vmatprep.subr.bf16.mxu0 0
        %1265 = vmatpush1.bf16.msra.mxu0 %v1241
        %1266 = vmatprep.subr.bf16.mxu0 0
        %1267 = vmatpush1.bf16.msra.mxu0 0
        %1268 = vmatprep.subr.bf16.mxu0 0
        %1269 = vmatpush1.bf16.msra.mxu0 0
        %1270 = vmatprep.subr.bf16.mxu0 0
        %1271 = vmatpush1.bf16.msra.mxu0 0
        %1272 = vmatprep.subr.bf16.mxu0 0
        %1273 = vmatpush1.bf16.msra.mxu0 0
        %1274 = vmatprep.subr.bf16.mxu0 0
        %1275 = vmatpush1.bf16.msra.mxu0 0
        %1276 = vmatprep.subr.bf16.mxu0 0
        %1277 = vmatpush1.bf16.msra.mxu0 0
        %1278 = vmatprep.subr.bf16.mxu0 0
        %1279 = vmatpush1.bf16.msra.mxu0 0
        %1280 = vmatprep.subr.bf16.mxu0 0
        %1281 = vmatpush1.bf16.msra.mxu0 0
        %1282 = vmatprep.mubr.bf16.mxu0 0
        %1283 = vmatmul.mubr.bf16.gmra.mrb[0].mxu0 %v1184
        %v1284 = vpop.f32.mrb[0].mxu0
        %v1285 = vadd.f32 %v432, %v1284
        %v1286 = vpop.f32.mrb[0].mxu0
        %v1287 = vpop.f32.mrb[0].mxu0
        %v1288 = vpop.f32.mrb[0].mxu0
        %1289 = vdwg.mxu0
        %1290 = vst [vmem:[%s423] sm:$0xff] %v1285
        %s1291 = sand.u32 %s214, 1
        %s1292 = scalar_lea.sflag [#allocation4], %s1291
        %s1293 = sand.u32 %s214, 1
        %s1294 = smul.addr %s1293, 8
        %s1295 = scalar_lea.vmem [#allocation11], %s1294
        %s1296 = sand.u32 %s242, 1
        %s1297 = scalar_lea.sflag [#allocation13], %s1296
        %s1298 = sand.u32 %s242, 1
        %s1299 = smul.addr %s1298, 16
        %s1300 = scalar_lea.vmem [#allocation12], %s1299
        // Predicated region
        $region69: #{tpu_custom_call.1} parent=47 // pred_check
          %p1301 = pneg %p224
        $region70: #{tpu_custom_call.1} parent=47 // pred_check_branch
          %1303 = sbr.rel (%p1301) target = $region72
        $region71: #{tpu_custom_call.1} parent=47 // pred_region
          %s1305 = ssub.s32 128, 128
          %1306 = vsyncadd %s1292, %s1305
          %s1307 = sadd.s32 %s38, %s37
          %s1308 = smul.addr %s1307, 128
          %s1309 = scalar_lea.hbm %s7, %s1308
          %s1311 = sshll.u32 %s1295, 4
          %s1312 = int_to_ptr.vmem [resolvable:$true] %s1311
          %1314 = dma.vmem_to_hbm [thread:$0]  %s1312, 128, %s1309, %s1292
        $region72: #{tpu_custom_call.1} parent=47 // pred_fallthru
          _
        // Predicated region
        $region73: #{tpu_custom_call.1} parent=47 // pred_check
          %p1315 = pneg %p252
        $region74: #{tpu_custom_call.1} parent=47 // pred_check_branch
          %1317 = sbr.rel (%p1315) target = $region76
        $region75: #{tpu_custom_call.1} parent=47 // pred_region
          %s1319 = ssub.s32 256, 256
          %1320 = vsyncadd %s1297, %s1319
          %s1321 = smul.addr %s37, 4
          %s1322 = sadd.s32 %s38, %s1321
          %s1323 = smul.addr %s1322, 64
          %s1324 = scalar_lea.hbm %s8, %s1323
          %s1325 = sshll.u32 %s1300, 4
          %s1326 = int_to_ptr.vmem [resolvable:$true] %s1325
          %1331 = dma.vmem_to_hbm [thread:$0]  %s1326, 256, %s1324, %s1297, 64, 64, 4
        $region76: #{tpu_custom_call.1} parent=47 // pred_fallthru
          _
      $region48: #{tpu_custom_call.1} parent=5 // pred_fallthru
        _
      %p1332 = scmp.le.s32.totalorder 2, %s28
      // Predicated region
      $region77: #{tpu_custom_call.1} parent=5 // pred_check
        %p1333 = pneg %p1332
      $region78: #{tpu_custom_call.1} parent=5 // pred_check_branch
        %1335 = sbr.rel (%p1333) target = $region80
      $region79: #{tpu_custom_call.1} parent=5 // pred_region
        %s1336 = ssub.s32 %s28, 2
        // Predicated region
        $region81: #{tpu_custom_call.1} parent=79 // pred_check
          %p1337 = pneg %p230
        $region82: #{tpu_custom_call.1} parent=79 // pred_check_branch
          %1339 = sbr.rel (%p1337) target = $region84
        $region83: #{tpu_custom_call.1} parent=79 // pred_region
          %s1340 = sand.u32 %s215, 1
          %s1341 = scalar_lea.sflag [#allocation4], %s1340
          %s1342 = sand.u32 %s215, 1
          %s1343 = smul.addr %s1342, 8
          %s1344 = scalar_lea.vmem [#allocation11], %s1343
          %1345 = dma.done %s1341, 128
        $region84: #{tpu_custom_call.1} parent=79 // pred_fallthru
          _
        // Predicated region
        $region85: #{tpu_custom_call.1} parent=79 // pred_check
          %p1346 = pneg %p258
        $region86: #{tpu_custom_call.1} parent=79 // pred_check_branch
          %1348 = sbr.rel (%p1346) target = $region88
        $region87: #{tpu_custom_call.1} parent=79 // pred_region
          %s1349 = sand.u32 %s243, 1
          %s1350 = scalar_lea.sflag [#allocation13], %s1349
          %s1351 = sand.u32 %s243, 1
          %s1352 = smul.addr %s1351, 16
          %s1353 = scalar_lea.vmem [#allocation12], %s1352
          %1354 = dma.done %s1350, 256
        $region88: #{tpu_custom_call.1} parent=79 // pred_fallthru
          _
      $region80: #{tpu_custom_call.1} parent=5 // pred_fallthru
        _
    $region6: #{tpu_custom_call.1} parent=1 // loop_footer
      %s32 = sadd.s32 1, %s28
    $region7: #{tpu_custom_call.1} parent=1 // loop_footer_branch
      %27 = sbr.rel target = $region3
    $region8: #{tpu_custom_call.1} parent=1 // loop_exit
      _
    %1355 = vsyncpa [#allocation3], 1
    %s1356 = scalar_lea.sflag [#allocation3], 1
    %1357 = vsyncpa %s1356, 1
    %1358 = vsyncpa [#allocation6], 1
    %s1359 = scalar_lea.sflag [#allocation6], 1
    %1360 = vsyncpa %s1359, 1
    %1361 = vsyncpa [#allocation9], 1
    %1362 = vsyncpa [#allocation4], 1
    %s1363 = scalar_lea.sflag [#allocation4], 1
    %1364 = vsyncpa %s1363, 1
    %1365 = vsyncpa [#allocation13], 1
    %s1366 = scalar_lea.sflag [#allocation13], 1
    %1367 = vsyncpa %s1366, 1

</llo_original>
